<compile_context>
chip_gen: v5e
topology: v5e:2x2
jax: 0.10.0
libtpu: 0.0.40
codegen_flags: <defaults>
</compile_context>

<pallas_src>
import jax
import jax.numpy as jnp
from jax.experimental import pallas as pl
from jax.experimental.pallas import tpu as pltpu


def encoder_kernel(self_ref, mask_ref, feats_ref, w_ref, out_ref,
                   neigh_acc, deg_acc):
    k = pl.program_id(1)

    @pl.when(k == 0)
    def _():
        neigh_acc[...] = jnp.zeros_like(neigh_acc)
        deg_acc[...] = jnp.zeros_like(deg_acc)

    # int8 0/1 mask tile -> bf16 for the MXU (cheap VPU cast, hidden under the DMA).
    mask = mask_ref[...].astype(jnp.bfloat16)            # [TB, TN]
    feats = feats_ref[...]                                # [TN, D] bf16

    # Mean-aggregator partial sums over this node chunk (MXU, f32 accumulation).
    neigh_acc[...] += jnp.dot(mask, feats, preferred_element_type=jnp.float32)
    deg_acc[...] += jnp.sum(mask, axis=-1, keepdims=True, dtype=jnp.float32)

    @pl.when(k == pl.num_programs(1) - 1)
    def _():
        deg = jnp.maximum(deg_acc[...], 1.0)              # guard isolated nodes
        neigh_mean = (neigh_acc[...] / deg).astype(jnp.bfloat16)
        # combined @ W as a single K = 2D matmul (fills the 256-wide MXU on v6e/v7x).
        combined = jnp.concatenate([self_ref[...], neigh_mean], axis=-1)   # [TB, 2D]
        proj = jnp.dot(combined, w_ref[...], preferred_element_type=jnp.float32)
        out_ref[...] = jnp.maximum(proj, 0.0).astype(out_ref.dtype)


def _largest_tile(dim, preferred, unit):
    """Largest multiple of `unit` that divides `dim` and is <= preferred (else full dim)."""
    if dim <= preferred:
        return dim
    t = (preferred // unit) * unit
    while t >= unit:
        if dim % t == 0:
            return t
        t -= unit
    return dim   # block == full array dim is always a legal block shape


def encoder_forward(nodes, adj_mask, features, weight, *, tb=None, tn=None):
    """nodes: [B] int, adj_mask: [B, N] (0/1), features: [N, D], weight: [2D, E] -> [B, E] f32"""
    B = nodes.shape[0]
    N, D = features.shape
    E = weight.shape[1]
    assert adj_mask.shape == (B, N)
    assert weight.shape[0] == 2 * D

    # --- generation-aware VMEM budget -------------------------------------------------
    try:
        vmem_cap = int(pltpu.get_tpu_info().vmem_capacity_bytes)
    except Exception:
        vmem_cap = 64 * 1024 * 1024           # conservative (v7x-sized) fallback
    vmem_budget = int(0.65 * vmem_cap)        # headroom for compiler-internal scratch

    # --- tile selection ----------------------------------------------------------------
    tb_pref = 256 if tb is None else tb
    tn_pref = 512 if tn is None else tn
    if B >= 64:
        tb_pref = min(tb_pref, B // 2)        # keep >= 2 row tiles for both v7x TCs
    tb = _largest_tile(B, tb_pref, 32)        # 32: safe sublane unit for int8/bf16/f32
    tn = _largest_tile(N, tn_pref, 128)       # lane-aligned node chunks

    def vmem_estimate(tb_, tn_):
        return (2 * tb_ * tn_ * 1             # mask tiles (int8, double-buffered)
                + 2 * tn_ * D * 2             # feature chunks (bf16)
                + 2 * tb_ * D * 2             # self-feature tile (bf16)
                + 2 * 2 * D * E * 2           # weight (bf16, double-buffered)
                + 2 * tb_ * E * 4             # output tile (f32)
                + tb_ * D * 4 + tb_ * 128 * 4)  # accumulators (deg padded to a lane)

    prev = None
    while vmem_estimate(tb, tn) > vmem_budget and (tb, tn) != prev:
        prev = (tb, tn)
        if tn > 128:
            tn = _largest_tile(N, max(128, tn // 2), 128)
        elif tb > 32:
            tb = _largest_tile(B, max(32, tb // 2), 32)

    assert B % tb == 0 and N % tn == 0

    # --- host-side dtype prep ------------------------------------------------------------
    feat_bf = features.astype(jnp.bfloat16)
    self_bf = feat_bf[nodes.astype(jnp.int32)]          # [B, D] bf16 self-feature gather
    adj_i8 = adj_mask.astype(jnp.int8)                  # 0/1 mask: halve the HBM stream
    w_bf = weight.astype(jnp.bfloat16)

    vmem_limit = int(min(vmem_budget, max(8 * 1024 * 1024, 4 * vmem_estimate(tb, tn))))

    return pl.pallas_call(
        encoder_kernel,
        out_shape=jax.ShapeDtypeStruct((B, E), jnp.float32),
        grid_spec=pltpu.PrefetchScalarGridSpec(
            num_scalar_prefetch=0,
            grid=(B // tb, N // tn),
            in_specs=[
                pl.BlockSpec((tb, D), lambda i, k: (i, 0)),       # self feats (resident over k)
                pl.BlockSpec((tb, tn), lambda i, k: (i, k)),      # adjacency mask tile (int8)
                pl.BlockSpec((tn, D), lambda i, k: (k, 0)),       # features chunk
                pl.BlockSpec((2 * D, E), lambda i, k: (0, 0)),    # full weight (resident)
            ],
            out_specs=pl.BlockSpec((tb, E), lambda i, k: (i, 0)),
            scratch_shapes=[
                pltpu.VMEM((tb, D), jnp.float32),   # neighbor-sum accumulator
                pltpu.VMEM((tb, 1), jnp.float32),   # degree accumulator
            ],
        ),
        compiler_params=pltpu.CompilerParams(
            dimension_semantics=("parallel", "arbitrary"),
            vmem_limit_bytes=vmem_limit,
        ),
    )(self_bf, adj_i8, feat_bf, w_bf)


def encoder_reference(nodes, adj_mask, features, weight):
    f = features.astype(jnp.float32)
    m = adj_mask.astype(jnp.float32)
    w = weight.astype(jnp.float32)
    self_feats = f[nodes]
    deg = jnp.maximum(jnp.sum(m, axis=-1, keepdims=True), 1.0)
    neigh_mean = (m @ f) / deg
    combined = jnp.concatenate([self_feats, neigh_mean], axis=1)
    return jnp.maximum(combined @ w, 0.0)


if __name__ == "__main__":
    key = jax.random.PRNGKey(0)
    k_feat, k_w, k_adj, k_nodes = jax.random.split(key, 4)

    # Small but tiling-exercising shapes: grid = (B/tb, N/tn) = (2, 2) at tb=128, tn=512.
    num_nodes, feature_dim, embed_dim, batch = 1024, 128, 128, 256

    features = jax.random.normal(k_feat, (num_nodes, feature_dim), jnp.float32)
    # weight: nn.Parameter(torch.FloatTensor(2*feature_dim, embed_dim)) — deterministic init.
    weight = jax.random.normal(k_w, (2 * feature_dim, embed_dim), jnp.float32) * 0.05

    # adj_lists + num_sample modelled as a pre-sampled dense 0/1 neighbor mask.
    adj_mask = (jax.random.uniform(k_adj, (batch, num_nodes)) < 0.05).astype(jnp.float32)
    adj_mask = adj_mask.at[0].set(0.0)   # one isolated node -> exercises the degree clamp

    nodes = jax.random.randint(k_nodes, (batch,), 0, num_nodes)

    out = encoder_forward(nodes, adj_mask, features, weight)
    out = jax.block_until_ready(out)

    # Reference in f32 from the same bf16-rounded inputs the kernel feeds the MXU.
    ref = encoder_reference(nodes,
                            adj_mask.astype(jnp.bfloat16),
                            features.astype(jnp.bfloat16),
                            weight.astype(jnp.bfloat16))

    assert out.shape == (batch, embed_dim)
    max_err = float(jnp.max(jnp.abs(out - ref)))
    assert jnp.allclose(out, ref, atol=2e-2, rtol=2e-2), \
        f"mismatch vs JAX reference (max abs err {max_err})"

    print("KERNEL_OK")
</pallas_src>

<mosaic_0001>
module attributes {stable_mosaic.version = 11 : i64} {
  func.func @encoder_kernel(%arg0: i32, %arg1: i32, %arg2: memref<128x128xbf16, #tpu.memory_space<vmem>>, %arg3: memref<128x512xi8, #tpu.memory_space<vmem>>, %arg4: memref<512x128xbf16, #tpu.memory_space<vmem>>, %arg5: memref<256x128xbf16, #tpu.memory_space<vmem>>, %arg6: memref<128x128xf32, #tpu.memory_space<vmem>>, %arg7: memref<128x128xf32, #tpu.memory_space<vmem>>, %arg8: memref<128x1xf32, #tpu.memory_space<vmem>>) attributes {dimension_semantics = [#tpu.dimension_semantics<parallel>, #tpu.dimension_semantics<arbitrary>], iteration_bounds = array<i64: 2, 2>, scalar_prefetch = 0 : i64, scratch_operands = 2 : i64, tpu.core_type = #tpu.core_type<tc>, window_params = [{transform_indices = @transform_0, window_bounds = array<i64: 128, 128>}, {transform_indices = @transform_1, window_bounds = array<i64: 128, 512>}, {transform_indices = @transform_2, window_bounds = array<i64: 512, 128>}, {pipeline_mode = #tpu.pipeline_mode<synchronous>, transform_indices = @transform_3, window_bounds = array<i64: 256, 128>}, {transform_indices = @transform_4, window_bounds = array<i64: 128, 128>}]} {
    %c0_i32 = arith.constant 0 : i32
    %0 = arith.cmpi eq, %arg1, %c0_i32 : i32
    %1 = arith.extui %0 : i1 to i32
    %c0_i32_0 = arith.constant 0 : i32
    %2 = arith.cmpi ne, %1, %c0_i32_0 : i32
    scf.if %2 {
      %cst_14 = arith.constant 0.000000e+00 : f32
      %19 = vector.broadcast %cst_14 : f32 to vector<128x128xf32>
      %c0_15 = arith.constant 0 : index
      %c0_16 = arith.constant 0 : index
      %20 = vector.load %arg7[%c0_15, %c0_16] : memref<128x128xf32, #tpu.memory_space<vmem>>, vector<128x128xf32>
      tpu.vector_store %arg7[%c0_15, %c0_16], %19 {strides = array<i32>} : memref<128x128xf32, #tpu.memory_space<vmem>>, vector<128x128xf32>,
      %cst_17 = arith.constant 0.000000e+00 : f32
      %21 = vector.broadcast %cst_17 : f32 to vector<128x1xf32>
      %c0_18 = arith.constant 0 : index
      %c0_19 = arith.constant 0 : index
      %22 = vector.load %arg8[%c0_18, %c0_19] : memref<128x1xf32, #tpu.memory_space<vmem>>, vector<128x1xf32>
      tpu.vector_store %arg8[%c0_18, %c0_19], %21 {strides = array<i32>} : memref<128x1xf32, #tpu.memory_space<vmem>>, vector<128x1xf32>,
    } else {
    }
    %c0 = arith.constant 0 : index
    %c0_1 = arith.constant 0 : index
    %3 = vector.load %arg3[%c0, %c0_1] : memref<128x512xi8, #tpu.memory_space<vmem>>, vector<128x512xi8>
    %4 = arith.sitofp %3 : vector<128x512xi8> to vector<128x512xbf16>
    %c0_2 = arith.constant 0 : index
    %c0_3 = arith.constant 0 : index
    %5 = vector.load %arg4[%c0_2, %c0_3] : memref<512x128xbf16, #tpu.memory_space<vmem>>, vector<512x128xbf16>
    %c0_4 = arith.constant 0 : index
    %c0_5 = arith.constant 0 : index
    %6 = vector.load %arg7[%c0_4, %c0_5] : memref<128x128xf32, #tpu.memory_space<vmem>>, vector<128x128xf32>
    %cst = arith.constant dense<0.000000e+00> : vector<128x128xf32>
    %7 = tpu.matmul %4, %5, %cst {dimension_numbers = #tpu.dot_dimension_numbers<[1], [0], [0], [1], [0, 0, 1, 1], [], []>} : vector<128x512xbf16>, vector<512x128xbf16>, vector<128x128xf32> -> vector<128x128xf32>
    %8 = arith.addf %6, %7 : vector<128x128xf32>
    %c0_6 = arith.constant 0 : index
    %c0_7 = arith.constant 0 : index
    %9 = vector.load %arg7[%c0_6, %c0_7] : memref<128x128xf32, #tpu.memory_space<vmem>>, vector<128x128xf32>
    tpu.vector_store %arg7[%c0_6, %c0_7], %8 {strides = array<i32>} : memref<128x128xf32, #tpu.memory_space<vmem>>, vector<128x128xf32>,
    %c0_8 = arith.constant 0 : index
    %c0_9 = arith.constant 0 : index
    %10 = vector.load %arg8[%c0_8, %c0_9] : memref<128x1xf32, #tpu.memory_space<vmem>>, vector<128x1xf32>
    %11 = arith.extf %4 : vector<128x512xbf16> to vector<128x512xf32>
    %cst_10 = arith.constant dense<0.000000e+00> : vector<128xf32>
    %12 = vector.multi_reduction <add>, %11, %cst_10 [1] : vector<128x512xf32> to vector<128xf32>
    %13 = vector.shape_cast %12 : vector<128xf32> to vector<128x1xf32>
    %14 = arith.addf %10, %13 : vector<128x1xf32>
    %c0_11 = arith.constant 0 : index
    %c0_12 = arith.constant 0 : index
    %15 = vector.load %arg8[%c0_11, %c0_12] : memref<128x1xf32, #tpu.memory_space<vmem>>, vector<128x1xf32>
    tpu.vector_store %arg8[%c0_11, %c0_12], %14 {strides = array<i32>} : memref<128x1xf32, #tpu.memory_space<vmem>>, vector<128x1xf32>,
    %c1_i32 = arith.constant 1 : i32
    %16 = arith.cmpi eq, %arg1, %c1_i32 : i32
    %17 = arith.extui %16 : i1 to i32
    %c0_i32_13 = arith.constant 0 : i32
    %18 = arith.cmpi ne, %17, %c0_i32_13 : i32
    scf.if %18 {
      %c0_14 = arith.constant 0 : index
      %c0_15 = arith.constant 0 : index
      %19 = vector.load %arg8[%c0_14, %c0_15] : memref<128x1xf32, #tpu.memory_space<vmem>>, vector<128x1xf32>
      %cst_16 = arith.constant 1.000000e+00 : f32
      %20 = vector.broadcast %cst_16 : f32 to vector<128x1xf32>
      %21 = arith.maximumf %19, %20 : vector<128x1xf32>
      %c0_17 = arith.constant 0 : index
      %c0_18 = arith.constant 0 : index
      %22 = vector.load %arg7[%c0_17, %c0_18] : memref<128x128xf32, #tpu.memory_space<vmem>>, vector<128x128xf32>
      %23 = vector.broadcast %21 : vector<128x1xf32> to vector<128x128xf32>
      %24 = arith.divf %22, %23 : vector<128x128xf32>
      %25 = arith.truncf %24 : vector<128x128xf32> to vector<128x128xbf16>
      %c0_19 = arith.constant 0 : index
      %c0_20 = arith.constant 0 : index
      %26 = vector.load %arg2[%c0_19, %c0_20] : memref<128x128xbf16, #tpu.memory_space<vmem>>, vector<128x128xbf16>
      %27 = tpu.concatenate %26, %25 in 1 : vector<128x128xbf16>, vector<128x128xbf16> -> vector<128x256xbf16>
      %c0_21 = arith.constant 0 : index
      %c0_22 = arith.constant 0 : index
      %28 = vector.load %arg5[%c0_21, %c0_22] : memref<256x128xbf16, #tpu.memory_space<vmem>>, vector<256x128xbf16>
      %cst_23 = arith.constant dense<0.000000e+00> : vector<128x128xf32>
      %29 = tpu.matmul %27, %28, %cst_23 {dimension_numbers = #tpu.dot_dimension_numbers<[1], [0], [0], [1], [0, 0, 1, 1], [], []>} : vector<128x256xbf16>, vector<256x128xbf16>, vector<128x128xf32> -> vector<128x128xf32>
      %cst_24 = arith.constant 0.000000e+00 : f32
      %30 = vector.broadcast %cst_24 : f32 to vector<128x128xf32>
      %31 = arith.maximumf %29, %30 : vector<128x128xf32>
      %c0_25 = arith.constant 0 : index
      %c0_26 = arith.constant 0 : index
      %32 = vector.load %arg6[%c0_25, %c0_26] : memref<128x128xf32, #tpu.memory_space<vmem>>, vector<128x128xf32>
      tpu.vector_store %arg6[%c0_25, %c0_26], %31 {strides = array<i32>} : memref<128x128xf32, #tpu.memory_space<vmem>>, vector<128x128xf32>,
    } else {
    }
    return
  }
  func.func @transform_0(%arg0: i32, %arg1: i32) -> (i32, i32) {
    %c0_i32 = arith.constant 0 : i32
    %c0_i32_0 = arith.constant 0 : i32
    return %arg0, %c0_i32 : i32, i32
  }
  func.func @transform_1(%arg0: i32, %arg1: i32) -> (i32, i32) {
    %c0_i32 = arith.constant 0 : i32
    return %arg0, %arg1 : i32, i32
  }
  func.func @transform_2(%arg0: i32, %arg1: i32) -> (i32, i32) {
    %c0_i32 = arith.constant 0 : i32
    %c0_i32_0 = arith.constant 0 : i32
    return %arg1, %c0_i32 : i32, i32
  }
  func.func @transform_3(%arg0: i32, %arg1: i32) -> (i32, i32) {
    %c0_i32 = arith.constant 0 : i32
    %c0_i32_0 = arith.constant 0 : i32
    %c0_i32_1 = arith.constant 0 : i32
    return %c0_i32, %c0_i32_0 : i32, i32
  }
  func.func @transform_4(%arg0: i32, %arg1: i32) -> (i32, i32) {
    %c0_i32 = arith.constant 0 : i32
    %c0_i32_0 = arith.constant 0 : i32
    return %arg0, %c0_i32 : i32, i32
  }
}

</mosaic_0001>

<llo_original>
// kernel: tpu_custom_call.1
$region0: #{tpu_custom_call.1}
  #allocation0 [shape = 'u32[]', space=smem, size = 0x4, offset = 0x4, fixed_abs, tag = 'smem constant byte address 0x4 - core index']
  #allocation1 [shape = 'u32[72,128]{1,0:T(1,128)}', space=vmem, size = 0x9000, scoped, tag = 'internal scratch']
  #allocation2 [shape = 'f32[128,128]{1,0:T(8,128)}', space=vmem, size = 0x10000, scoped, tag = 'scratch operand']
  #allocation3 [shape = 'f32[128,1]{1,0:T(8,128)}', space=vmem, size = 0x10000, scoped, tag = 'scratch operand']
  %s0 = inlined_call_operand.hbm [shape: bf16[256,128], index: 0, kind: input, shape index: {}]
  %s1 = inlined_call_operand.hbm [shape: s8[256,1024], index: 1, kind: input, shape index: {}]
  %s2 = inlined_call_operand.hbm [shape: bf16[1024,128], index: 2, kind: input, shape index: {}]
  %s3 = inlined_call_operand.hbm [shape: bf16[256,128], index: 3, kind: input, shape index: {}]
  %s4 = inlined_call_operand.hbm [shape: f32[256,128], index: 4, kind: output, shape index: {}]
  %s5 = sld [smem:[#allocation0]]
  $region73: #{tpu_custom_call.1} parent=0
    _
  %s7 = ssub.s32 1, %s5
  %s8 = scalar_select 0, %s7, %s5
  $region1: #{tpu_custom_call.1} parent=0
    #allocation4 [shape = 'u8[65536]{0}', space=vmem, size = 0x10000, scoped, tag = 'input window, operand 0']
    #allocation5 [shape = 's32[2]{0}', space=sflag, size = 0x8, scoped, tag = 'scoped memory for tpu_custom_call.1']
    #allocation6 [shape = 's32[2]{0}', space=sflag, size = 0x8, scoped, tag = 'scoped memory for tpu_custom_call.1']
    #allocation7 [shape = 'u8[131072]{0}', space=vmem, size = 0x20000, scoped, tag = 'input window, operand 1']
    #allocation8 [shape = 's32[2]{0}', space=sflag, size = 0x8, scoped, tag = 'scoped memory for tpu_custom_call.1']
    #allocation9 [shape = 'u8[262144]{0}', space=vmem, size = 0x40000, scoped, tag = 'input window, operand 2']
    #allocation10 [shape = 'u8[65536]{0}', space=vmem, size = 0x10000, scoped, tag = 'input window, operand 3, single buffered']
    #allocation11 [shape = 's32[1]{0}', space=sflag, size = 0x4, scoped, tag = 'scoped memory for tpu_custom_call.1']
    #allocation12 [shape = 'u8[131072]{0}', space=vmem, size = 0x20000, scoped, tag = 'output window, operand 0']
    %9 = vsyncpa [#allocation5], 0
    %s10 = scalar_lea.sflag [#allocation5], 1
    %11 = vsyncpa %s10, 0
    %12 = vsyncpa [#allocation8], 0
    %s13 = scalar_lea.sflag [#allocation8], 1
    %14 = vsyncpa %s13, 0
    %15 = vsyncpa [#allocation11], 0
    %16 = vsyncpa [#allocation6], 0
    %s17 = scalar_lea.sflag [#allocation6], 1
    %18 = vsyncpa %s17, 0
    loop: start=0, step=1, limit=6
    $region2: #{tpu_custom_call.1} parent=1 // loop_pre_header
      _
    $region3: #{tpu_custom_call.1} parent=1 // loop_header
      %s20 = sphi 0, %s24
      %p21 = scmp.ge.s32.totalorder %s20, 6
      %s27 = sphi 0, %s39
      %s28 = sphi 0, %s35
      %s29 = sphi 0, %s27
      %s30 = sphi 0, %s28
      %s31 = sphi 0, %s29
      %s32 = sphi 0, %s30
      %s42 = sphi 0, %s44
      %s45 = sphi 0, %s42
      %s46 = sphi 0, %s45
      %s62 = sphi 0, %s46
      %s70 = sphi 0, %s72
      %s73 = sphi 0, %s70
      %s74 = sphi 0, %s73
      %s90 = sphi 0, %s74
      %s96 = sphi 0, %s98
      %s99 = sphi 0, %s96
      %s100 = sphi 0, %s99
      %s116 = sphi 0, %s100
      %s120 = sphi 0, %s120
      %s122 = sphi 0, %s120
      %s123 = sphi 0, %s122
      %s137 = sphi 0, %s123
      %s143 = sphi 0, %s145
      %s146 = sphi 0, %s143
      %s147 = sphi 0, %s146
      %s163 = sphi 0, %s147
    $region4: #{tpu_custom_call.1} parent=1 // loop_header_branch
      %23 = sbr.rel (%p21) target = $region8
    $region5: #{tpu_custom_call.1} parent=1 // loop_body
      %s25 = ssub.s32 %s20, 1
      %s26 = ssub.s32 %s20, 2
      %s33 = sadd.s32 1, %s28
      %p34 = scmp.ge.s32.totalorder %s33, 2
      %s35 = scalar_select %p34, 0, %s33
      %s36 = sadd.s32 1, %s27
      %s37 = scalar_select %p34, %s36, %s27
      %p38 = scmp.ge.s32.totalorder %s37, 2
      %s39 = scalar_select %p38, 0, %s37
      %s40 = ssub.s32 %s27, %s39
      %p41 = scmp.eq.s32.totalorder %s40, 0
      %s43 = sadd.s32 %s42, 1
      %s44 = scalar_select %p41, %s42, %s43
      %p47 = pneg %p41
      %p48 = scmp.eq.s32.totalorder %s20, 3
      %p49 = por %p47, %p48
      %p50 = scmp.ne.s32.totalorder %s42, %s45
      %p51 = scmp.eq.s32.totalorder %s20, 0
      %p52 = por %p50, %p51
      %p53 = scmp.ne.s32.totalorder %s42, %s45
      %p54 = scmp.eq.s32.totalorder %s25, 3
      %p55 = por %p53, %p54
      %p56 = scmp.ne.s32.totalorder %s45, %s46
      %p57 = scmp.eq.s32.totalorder %s25, 0
      %p58 = por %p56, %p57
      %p59 = scmp.ne.s32.totalorder %s45, %s46
      %p60 = scmp.eq.s32.totalorder %s26, 3
      %p61 = por %p59, %p60
      %p63 = scmp.ne.s32.totalorder %s46, %s62
      %p64 = scmp.eq.s32.totalorder %s26, 0
      %p65 = por %p63, %p64
      %s66 = ssub.s32 %s27, %s39
      %s67 = ssub.s32 %s28, %s35
      %s68 = sor.u32 %s66, %s67
      %p69 = scmp.eq.s32.totalorder %s68, 0
      %s71 = sadd.s32 %s70, 1
      %s72 = scalar_select %p69, %s70, %s71
      %p75 = pneg %p69
      %p76 = scmp.eq.s32.totalorder %s20, 3
      %p77 = por %p75, %p76
      %p78 = scmp.ne.s32.totalorder %s70, %s73
      %p79 = scmp.eq.s32.totalorder %s20, 0
      %p80 = por %p78, %p79
      %p81 = scmp.ne.s32.totalorder %s70, %s73
      %p82 = scmp.eq.s32.totalorder %s25, 3
      %p83 = por %p81, %p82
      %p84 = scmp.ne.s32.totalorder %s73, %s74
      %p85 = scmp.eq.s32.totalorder %s25, 0
      %p86 = por %p84, %p85
      %p87 = scmp.ne.s32.totalorder %s73, %s74
      %p88 = scmp.eq.s32.totalorder %s26, 3
      %p89 = por %p87, %p88
      %p91 = scmp.ne.s32.totalorder %s74, %s90
      %p92 = scmp.eq.s32.totalorder %s26, 0
      %p93 = por %p91, %p92
      %s94 = ssub.s32 %s28, %s35
      %p95 = scmp.eq.s32.totalorder %s94, 0
      %s97 = sadd.s32 %s96, 1
      %s98 = scalar_select %p95, %s96, %s97
      %p101 = pneg %p95
      %p102 = scmp.eq.s32.totalorder %s20, 3
      %p103 = por %p101, %p102
      %p104 = scmp.ne.s32.totalorder %s96, %s99
      %p105 = scmp.eq.s32.totalorder %s20, 0
      %p106 = por %p104, %p105
      %p107 = scmp.ne.s32.totalorder %s96, %s99
      %p108 = scmp.eq.s32.totalorder %s25, 3
      %p109 = por %p107, %p108
      %p110 = scmp.ne.s32.totalorder %s99, %s100
      %p111 = scmp.eq.s32.totalorder %s25, 0
      %p112 = por %p110, %p111
      %p113 = scmp.ne.s32.totalorder %s99, %s100
      %p114 = scmp.eq.s32.totalorder %s26, 3
      %p115 = por %p113, %p114
      %p117 = scmp.ne.s32.totalorder %s100, %s116
      %p118 = scmp.eq.s32.totalorder %s26, 0
      %p119 = por %p117, %p118
      %s121 = sadd.s32 %s120, 1
      %p124 = scmp.eq.s32.totalorder %s20, 3
      %p125 = scmp.ne.s32.totalorder %s120, %s122
      %p126 = scmp.eq.s32.totalorder %s20, 0
      %p127 = por %p125, %p126
      %p128 = scmp.ne.s32.totalorder %s120, %s122
      %p129 = scmp.eq.s32.totalorder %s25, 3
      %p130 = por %p128, %p129
      %p131 = scmp.ne.s32.totalorder %s122, %s123
      %p132 = scmp.eq.s32.totalorder %s25, 0
      %p133 = por %p131, %p132
      %p134 = scmp.ne.s32.totalorder %s122, %s123
      %p135 = scmp.eq.s32.totalorder %s26, 3
      %p136 = por %p134, %p135
      %p138 = scmp.ne.s32.totalorder %s123, %s137
      %p139 = scmp.eq.s32.totalorder %s26, 0
      %p140 = por %p138, %p139
      %s141 = ssub.s32 %s27, %s39
      %p142 = scmp.eq.s32.totalorder %s141, 0
      %s144 = sadd.s32 %s143, 1
      %s145 = scalar_select %p142, %s143, %s144
      %p148 = pneg %p142
      %p149 = scmp.eq.s32.totalorder %s20, 3
      %p150 = por %p148, %p149
      %p151 = scmp.ne.s32.totalorder %s143, %s146
      %p152 = scmp.eq.s32.totalorder %s20, 0
      %p153 = por %p151, %p152
      %p154 = scmp.ne.s32.totalorder %s143, %s146
      %p155 = scmp.eq.s32.totalorder %s25, 3
      %p156 = por %p154, %p155
      %p157 = scmp.ne.s32.totalorder %s146, %s147
      %p158 = scmp.eq.s32.totalorder %s25, 0
      %p159 = por %p157, %p158
      %p160 = scmp.ne.s32.totalorder %s146, %s147
      %p161 = scmp.eq.s32.totalorder %s26, 3
      %p162 = por %p160, %p161
      %p164 = scmp.ne.s32.totalorder %s147, %s163
      %p165 = scmp.eq.s32.totalorder %s26, 0
      %p166 = por %p164, %p165
      %p167 = scmp.le.s32.totalorder 1, %s20
      %p168 = scmp.lt.s32.totalorder %s20, 5
      %p169 = pnand %p167, %p168
      %p170 = pneg %p169
      // Predicated region
      $region9: #{tpu_custom_call.1} parent=5 // pred_check
        _
      $region10: #{tpu_custom_call.1} parent=5 // pred_check_branch
        %172 = sbr.rel (%p169) target = $region12
      $region11: #{tpu_custom_call.1} parent=5 // pred_region
        %s173 = ssub.s32 %s20, 1
        // Predicated region
        $region13: #{tpu_custom_call.1} parent=11 // pred_check
          %p174 = pneg %p133
        $region14: #{tpu_custom_call.1} parent=11 // pred_check_branch
          %176 = sbr.rel (%p174) target = $region16
        $region15: #{tpu_custom_call.1} parent=11 // pred_region
          %178 = vsyncadd [#allocation11], 0
          %s179 = sshll.u32 %s3, 4
          %s180 = int_to_ptr.hbm [resolvable:$true] %s179
          %s181 = sshll.u32 [#allocation10], 4
          %s182 = int_to_ptr.vmem [resolvable:$true] %s181
          %187 = dma.hbm_to_vmem [thread:$0]  %s180, 2048, %s182, [#allocation11], 64, 64, 4
        $region16: #{tpu_custom_call.1} parent=11 // pred_fallthru
          _
      $region12: #{tpu_custom_call.1} parent=5 // pred_fallthru
        _
      %p188 = scmp.lt.s32.totalorder %s20, 4
      // Predicated region
      $region17: #{tpu_custom_call.1} parent=5 // pred_check
        %p189 = pneg %p188
      $region18: #{tpu_custom_call.1} parent=5 // pred_check_branch
        %191 = sbr.rel (%p189) target = $region20
      $region19: #{tpu_custom_call.1} parent=5 // pred_region
        // Predicated region
        $region21: #{tpu_custom_call.1} parent=19 // pred_check
          %p192 = pneg %p52
        $region22: #{tpu_custom_call.1} parent=19 // pred_check_branch
          %194 = sbr.rel (%p192) target = $region24
        $region23: #{tpu_custom_call.1} parent=19 // pred_region
          %s195 = sand.u32 %s42, 1
          %s196 = scalar_lea.sflag [#allocation5], %s195
          %s197 = sand.u32 %s42, 1
          %s198 = smul.addr %s197, 64
          %s199 = scalar_lea.vmem [#allocation4], %s198
          %s200 = smul.u32 16, %s27
          %202 = vsyncadd %s196, 0
          %s203 = smul.addr %s200, 4
          %s204 = scalar_lea.hbm %s0, %s203
          %s205 = sshll.u32 %s204, 4
          %s206 = int_to_ptr.hbm [resolvable:$true] %s205
          %s207 = sshll.u32 %s199, 4
          %s208 = int_to_ptr.vmem [resolvable:$true] %s207
          %213 = dma.hbm_to_vmem [thread:$0]  %s206, 1024, %s208, %s196, 64, 64, 4
        $region24: #{tpu_custom_call.1} parent=19 // pred_fallthru
          _
        // Predicated region
        $region25: #{tpu_custom_call.1} parent=19 // pred_check
          %p214 = pneg %p80
        $region26: #{tpu_custom_call.1} parent=19 // pred_check_branch
          %216 = sbr.rel (%p214) target = $region28
        $region27: #{tpu_custom_call.1} parent=19 // pred_region
          %s217 = sand.u32 %s20, 1
          %s218 = scalar_lea.sflag [#allocation8], %s217
          %s219 = sand.u32 %s70, 1
          %s220 = smul.addr %s219, 128
          %s221 = scalar_lea.vmem [#allocation7], %s220
          %s222 = smul.u32 4, %s27
          %s223 = smul.u32 4, %s28
          %225 = vsyncadd %s218, 0
          %s226 = smul.addr %s222, 8
          %s227 = sadd.s32 %s223, %s226
          %s228 = smul.addr %s227, 8
          %s229 = scalar_lea.hbm %s1, %s228
          %s230 = sshll.u32 %s229, 4
          %s231 = int_to_ptr.hbm [resolvable:$true] %s230
          %s232 = sshll.u32 %s221, 4
          %s233 = int_to_ptr.vmem [resolvable:$true] %s232
          %238 = dma.hbm_to_vmem [thread:$0]  %s231, 2048, %s233, %s218, 1024, 512, 32
        $region28: #{tpu_custom_call.1} parent=19 // pred_fallthru
          _
        // Predicated region
        $region29: #{tpu_custom_call.1} parent=19 // pred_check
          %p239 = pneg %p106
        $region30: #{tpu_custom_call.1} parent=19 // pred_check_branch
          %241 = sbr.rel (%p239) target = $region32
        $region31: #{tpu_custom_call.1} parent=19 // pred_region
          %s242 = sand.u32 %s20, 1
          %s243 = scalar_lea.sflag [#allocation8], %s242
          %s244 = sand.u32 %s96, 1
          %s245 = smul.addr %s244, 256
          %s246 = scalar_lea.vmem [#allocation9], %s245
          %s247 = smul.u32 64, %s28
          %249 = vsyncadd %s243, 0
          %s250 = smul.addr %s247, 4
          %s251 = scalar_lea.hbm %s2, %s250
          %s252 = sshll.u32 %s251, 4
          %s253 = int_to_ptr.hbm [resolvable:$true] %s252
          %s254 = sshll.u32 %s246, 4
          %s255 = int_to_ptr.vmem [resolvable:$true] %s254
          %260 = dma.hbm_to_vmem [thread:$0]  %s253, 4096, %s255, %s243, 64, 64, 4
        $region32: #{tpu_custom_call.1} parent=19 // pred_fallthru
          _
      $region20: #{tpu_custom_call.1} parent=5 // pred_fallthru
        _
      %p261 = scmp.le.s32.totalorder 1, %s20
      %p262 = scmp.lt.s32.totalorder %s20, 5
      %p263 = pnand %p261, %p262
      %p264 = pneg %p263
      // Predicated region
      $region33: #{tpu_custom_call.1} parent=5 // pred_check
        _
      $region34: #{tpu_custom_call.1} parent=5 // pred_check_branch
        %266 = sbr.rel (%p263) target = $region36
      $region35: #{tpu_custom_call.1} parent=5 // pred_region
        %s267 = ssub.s32 %s20, 1
        %s268 = sand.u32 %s45, 1
        %s269 = scalar_lea.sflag [#allocation5], %s268
        %s270 = sand.u32 %s45, 1
        %s271 = smul.addr %s270, 64
        %s272 = scalar_lea.vmem [#allocation4], %s271
        // Predicated region
        $region37: #{tpu_custom_call.1} parent=35 // pred_check
          %p273 = pneg %p58
        $region38: #{tpu_custom_call.1} parent=35 // pred_check_branch
          %275 = sbr.rel (%p273) target = $region40
        $region39: #{tpu_custom_call.1} parent=35 // pred_region
          %277 = dma.done %s269, 1024
        $region40: #{tpu_custom_call.1} parent=35 // pred_fallthru
          _
        %s278 = sand.u32 %s25, 1
        %s279 = scalar_lea.sflag [#allocation8], %s278
        %s280 = sand.u32 %s73, 1
        %s281 = smul.addr %s280, 128
        %s282 = scalar_lea.vmem [#allocation7], %s281
        // Predicated region
        $region41: #{tpu_custom_call.1} parent=35 // pred_check
          %p283 = pneg %p86
        $region42: #{tpu_custom_call.1} parent=35 // pred_check_branch
          %285 = sbr.rel (%p283) target = $region44
        $region43: #{tpu_custom_call.1} parent=35 // pred_region
          %287 = dma.done %s279, 2048
        $region44: #{tpu_custom_call.1} parent=35 // pred_fallthru
          _
        %s288 = sand.u32 %s25, 1
        %s289 = scalar_lea.sflag [#allocation8], %s288
        %s290 = sand.u32 %s99, 1
        %s291 = smul.addr %s290, 256
        %s292 = scalar_lea.vmem [#allocation9], %s291
        // Predicated region
        $region45: #{tpu_custom_call.1} parent=35 // pred_check
          %p293 = pneg %p112
        $region46: #{tpu_custom_call.1} parent=35 // pred_check_branch
          %295 = sbr.rel (%p293) target = $region48
        $region47: #{tpu_custom_call.1} parent=35 // pred_region
          %297 = dma.done %s289, 4096
        $region48: #{tpu_custom_call.1} parent=35 // pred_fallthru
          _
        // Predicated region
        $region49: #{tpu_custom_call.1} parent=35 // pred_check
          %p298 = pneg %p133
        $region50: #{tpu_custom_call.1} parent=35 // pred_check_branch
          %300 = sbr.rel (%p298) target = $region52
        $region51: #{tpu_custom_call.1} parent=35 // pred_region
          %302 = dma.done [#allocation11], 2048
        $region52: #{tpu_custom_call.1} parent=35 // pred_fallthru
          _
        %s303 = sand.u32 %s45, 1
        %s304 = scalar_lea.sflag [#allocation5], %s303
        %s305 = sand.u32 %s45, 1
        %s306 = smul.addr %s305, 64
        %s307 = scalar_lea.vmem [#allocation4], %s306
        %p308 = pneg %p58
        %p309 = pneg %p55
        %s310 = sand.u32 %s25, 1
        %s311 = scalar_lea.sflag [#allocation8], %s310
        %s312 = sand.u32 %s73, 1
        %s313 = smul.addr %s312, 128
        %s314 = scalar_lea.vmem [#allocation7], %s313
        %p315 = pneg %p86
        %p316 = pneg %p83
        %s317 = sand.u32 %s25, 1
        %s318 = scalar_lea.sflag [#allocation8], %s317
        %s319 = sand.u32 %s99, 1
        %s320 = smul.addr %s319, 256
        %s321 = scalar_lea.vmem [#allocation9], %s320
        %p322 = pneg %p112
        %p323 = pneg %p109
        %p324 = pneg %p133
        %p325 = pneg %p130
        %p326 = pneg %p159
        %p327 = pneg %p156
        %s328 = sand.u32 %s146, 1
        %s329 = scalar_lea.sflag [#allocation6], %s328
        %s330 = sand.u32 %s146, 1
        %s331 = smul.addr %s330, 128
        %s332 = scalar_lea.vmem [#allocation12], %s331
        %s333 = smul.u32 16, %s29
        %s334 = smul.u32 4, %s29
        %s335 = smul.u32 4, %s30
        %s336 = smul.u32 64, %s30
        %s337 = smul.u32 16, %s29
        %p338 = scmp.eq.s32.totalorder %s30, 0
        // Predicated region
        $region53: #{tpu_custom_call.1} parent=35 // pred_check
          %p339 = pneg %p338
        $region54: #{tpu_custom_call.1} parent=35 // pred_check_branch
          %341 = sbr.rel (%p339) target = $region56
        $region55: #{tpu_custom_call.1} parent=35 // pred_region
          %342 = vst [vmem:[#allocation2] sm:$0xff] 0.0
          %343 = vst [vmem:[#allocation2 + $0x8] sm:$0xff] 0.0
          %344 = vst [vmem:[#allocation2 + $0x10] sm:$0xff] 0.0
          %345 = vst [vmem:[#allocation2 + $0x18] sm:$0xff] 0.0
          %346 = vst [vmem:[#allocation2 + $0x20] sm:$0xff] 0.0
          %347 = vst [vmem:[#allocation2 + $0x28] sm:$0xff] 0.0
          %348 = vst [vmem:[#allocation2 + $0x30] sm:$0xff] 0.0
          %349 = vst [vmem:[#allocation2 + $0x38] sm:$0xff] 0.0
          %350 = vst [vmem:[#allocation2 + $0x40] sm:$0xff] 0.0
          %351 = vst [vmem:[#allocation2 + $0x48] sm:$0xff] 0.0
          %352 = vst [vmem:[#allocation2 + $0x50] sm:$0xff] 0.0
          %353 = vst [vmem:[#allocation2 + $0x58] sm:$0xff] 0.0
          %354 = vst [vmem:[#allocation2 + $0x60] sm:$0xff] 0.0
          %355 = vst [vmem:[#allocation2 + $0x68] sm:$0xff] 0.0
          %356 = vst [vmem:[#allocation2 + $0x70] sm:$0xff] 0.0
          %357 = vst [vmem:[#allocation2 + $0x78] sm:$0xff] 0.0
          %vm358 = vcmask 7168
          %359 = vst.msk [vmem:[#allocation3] sm:$0xff] %vm358, 0.0
          %360 = vst.msk [vmem:[#allocation3 + $0x8] sm:$0xff] %vm358, 0.0
          %361 = vst.msk [vmem:[#allocation3 + $0x10] sm:$0xff] %vm358, 0.0
          %362 = vst.msk [vmem:[#allocation3 + $0x18] sm:$0xff] %vm358, 0.0
          %363 = vst.msk [vmem:[#allocation3 + $0x20] sm:$0xff] %vm358, 0.0
          %364 = vst.msk [vmem:[#allocation3 + $0x28] sm:$0xff] %vm358, 0.0
          %365 = vst.msk [vmem:[#allocation3 + $0x30] sm:$0xff] %vm358, 0.0
          %366 = vst.msk [vmem:[#allocation3 + $0x38] sm:$0xff] %vm358, 0.0
          %367 = vst.msk [vmem:[#allocation3 + $0x40] sm:$0xff] %vm358, 0.0
          %368 = vst.msk [vmem:[#allocation3 + $0x48] sm:$0xff] %vm358, 0.0
          %369 = vst.msk [vmem:[#allocation3 + $0x50] sm:$0xff] %vm358, 0.0
          %370 = vst.msk [vmem:[#allocation3 + $0x58] sm:$0xff] %vm358, 0.0
          %371 = vst.msk [vmem:[#allocation3 + $0x60] sm:$0xff] %vm358, 0.0
          %372 = vst.msk [vmem:[#allocation3 + $0x68] sm:$0xff] %vm358, 0.0
          %373 = vst.msk [vmem:[#allocation3 + $0x70] sm:$0xff] %vm358, 0.0
          %374 = vst.msk [vmem:[#allocation3 + $0x78] sm:$0xff] %vm358, 0.0
        $region56: #{tpu_custom_call.1} parent=35 // pred_fallthru
          _
        %v375 = vld [vmem:[%s282] sm:$0xff]
        %v376 = vld [vmem:[%s282 + $0x8] sm:$0xff]
        %v377 = vld [vmem:[%s282 + $0x10] sm:$0xff]
        %v378 = vld [vmem:[%s282 + $0x18] sm:$0xff]
        %v379 = vld [vmem:[%s282 + $0x20] sm:$0xff]
        %v380 = vld [vmem:[%s282 + $0x28] sm:$0xff]
        %v381 = vld [vmem:[%s282 + $0x30] sm:$0xff]
        %v382 = vld [vmem:[%s282 + $0x38] sm:$0xff]
        %v383 = vld [vmem:[%s282 + $0x40] sm:$0xff]
        %v384 = vld [vmem:[%s282 + $0x48] sm:$0xff]
        %v385 = vld [vmem:[%s282 + $0x50] sm:$0xff]
        %v386 = vld [vmem:[%s282 + $0x58] sm:$0xff]
        %v387 = vld [vmem:[%s282 + $0x60] sm:$0xff]
        %v388 = vld [vmem:[%s282 + $0x68] sm:$0xff]
        %v389 = vld [vmem:[%s282 + $0x70] sm:$0xff]
        %v390 = vld [vmem:[%s282 + $0x78] sm:$0xff]
        %v391 = vunpack.c.0.s8 %v375
        %v392 = vunpack.c.0.s8 %v376
        %v393 = vunpack.c.0.s8 %v377
        %v394 = vunpack.c.0.s8 %v378
        %v395 = vunpack.c.1.s8 %v375
        %v396 = vunpack.c.1.s8 %v376
        %v397 = vunpack.c.1.s8 %v377
        %v398 = vunpack.c.1.s8 %v378
        %v399 = vunpack.c.2.s8 %v375
        %v400 = vunpack.c.2.s8 %v376
        %v401 = vunpack.c.2.s8 %v377
        %v402 = vunpack.c.2.s8 %v378
        %v403 = vunpack.c.3.s8 %v375
        %v404 = vunpack.c.3.s8 %v376
        %v405 = vunpack.c.3.s8 %v377
        %v406 = vunpack.c.3.s8 %v378
        %v407 = vunpack.c.0.s8 %v379
        %v408 = vunpack.c.0.s8 %v380
        %v409 = vunpack.c.0.s8 %v381
        %v410 = vunpack.c.0.s8 %v382
        %v411 = vunpack.c.1.s8 %v379
        %v412 = vunpack.c.1.s8 %v380
        %v413 = vunpack.c.1.s8 %v381
        %v414 = vunpack.c.1.s8 %v382
        %v415 = vunpack.c.2.s8 %v379
        %v416 = vunpack.c.2.s8 %v380
        %v417 = vunpack.c.2.s8 %v381
        %v418 = vunpack.c.2.s8 %v382
        %v419 = vunpack.c.3.s8 %v379
        %v420 = vunpack.c.3.s8 %v380
        %v421 = vunpack.c.3.s8 %v381
        %v422 = vunpack.c.3.s8 %v382
        %v423 = vunpack.c.0.s8 %v383
        %v424 = vunpack.c.0.s8 %v384
        %v425 = vunpack.c.0.s8 %v385
        %v426 = vunpack.c.0.s8 %v386
        %v427 = vunpack.c.1.s8 %v383
        %v428 = vunpack.c.1.s8 %v384
        %v429 = vunpack.c.1.s8 %v385
        %v430 = vunpack.c.1.s8 %v386
        %v431 = vunpack.c.2.s8 %v383
        %v432 = vunpack.c.2.s8 %v384
        %v433 = vunpack.c.2.s8 %v385
        %v434 = vunpack.c.2.s8 %v386
        %v435 = vunpack.c.3.s8 %v383
        %v436 = vunpack.c.3.s8 %v384
        %v437 = vunpack.c.3.s8 %v385
        %v438 = vunpack.c.3.s8 %v386
        %v439 = vunpack.c.0.s8 %v387
        %v440 = vunpack.c.0.s8 %v388
        %v441 = vunpack.c.0.s8 %v389
        %v442 = vunpack.c.0.s8 %v390
        %v443 = vunpack.c.1.s8 %v387
        %v444 = vunpack.c.1.s8 %v388
        %v445 = vunpack.c.1.s8 %v389
        %v446 = vunpack.c.1.s8 %v390
        %v447 = vunpack.c.2.s8 %v387
        %v448 = vunpack.c.2.s8 %v388
        %v449 = vunpack.c.2.s8 %v389
        %v450 = vunpack.c.2.s8 %v390
        %v451 = vunpack.c.3.s8 %v387
        %v452 = vunpack.c.3.s8 %v388
        %v453 = vunpack.c.3.s8 %v389
        %v454 = vunpack.c.3.s8 %v390
        %v455 = vcvt.s32.f32 %v391
        %v456 = vcvt.s32.f32 %v392
        %v457 = vcvt.s32.f32 %v393
        %v458 = vcvt.s32.f32 %v394
        %v459 = vcvt.s32.f32 %v395
        %v460 = vcvt.s32.f32 %v396
        %v461 = vcvt.s32.f32 %v397
        %v462 = vcvt.s32.f32 %v398
        %v463 = vcvt.s32.f32 %v399
        %v464 = vcvt.s32.f32 %v400
        %v465 = vcvt.s32.f32 %v401
        %v466 = vcvt.s32.f32 %v402
        %v467 = vcvt.s32.f32 %v403
        %v468 = vcvt.s32.f32 %v404
        %v469 = vcvt.s32.f32 %v405
        %v470 = vcvt.s32.f32 %v406
        %v471 = vcvt.s32.f32 %v407
        %v472 = vcvt.s32.f32 %v408
        %v473 = vcvt.s32.f32 %v409
        %v474 = vcvt.s32.f32 %v410
        %v475 = vcvt.s32.f32 %v411
        %v476 = vcvt.s32.f32 %v412
        %v477 = vcvt.s32.f32 %v413
        %v478 = vcvt.s32.f32 %v414
        %v479 = vcvt.s32.f32 %v415
        %v480 = vcvt.s32.f32 %v416
        %v481 = vcvt.s32.f32 %v417
        %v482 = vcvt.s32.f32 %v418
        %v483 = vcvt.s32.f32 %v419
        %v484 = vcvt.s32.f32 %v420
        %v485 = vcvt.s32.f32 %v421
        %v486 = vcvt.s32.f32 %v422
        %v487 = vcvt.s32.f32 %v423
        %v488 = vcvt.s32.f32 %v424
        %v489 = vcvt.s32.f32 %v425
        %v490 = vcvt.s32.f32 %v426
        %v491 = vcvt.s32.f32 %v427
        %v492 = vcvt.s32.f32 %v428
        %v493 = vcvt.s32.f32 %v429
        %v494 = vcvt.s32.f32 %v430
        %v495 = vcvt.s32.f32 %v431
        %v496 = vcvt.s32.f32 %v432
        %v497 = vcvt.s32.f32 %v433
        %v498 = vcvt.s32.f32 %v434
        %v499 = vcvt.s32.f32 %v435
        %v500 = vcvt.s32.f32 %v436
        %v501 = vcvt.s32.f32 %v437
        %v502 = vcvt.s32.f32 %v438
        %v503 = vcvt.s32.f32 %v439
        %v504 = vcvt.s32.f32 %v440
        %v505 = vcvt.s32.f32 %v441
        %v506 = vcvt.s32.f32 %v442
        %v507 = vcvt.s32.f32 %v443
        %v508 = vcvt.s32.f32 %v444
        %v509 = vcvt.s32.f32 %v445
        %v510 = vcvt.s32.f32 %v446
        %v511 = vcvt.s32.f32 %v447
        %v512 = vcvt.s32.f32 %v448
        %v513 = vcvt.s32.f32 %v449
        %v514 = vcvt.s32.f32 %v450
        %v515 = vcvt.s32.f32 %v451
        %v516 = vcvt.s32.f32 %v452
        %v517 = vcvt.s32.f32 %v453
        %v518 = vcvt.s32.f32 %v454
        %v519 = vpack.c.bf16 %v459, %v455
        %v520 = vpack.c.bf16 %v460, %v456
        %v521 = vpack.c.bf16 %v461, %v457
        %v522 = vpack.c.bf16 %v462, %v458
        %v523 = vpack.c.bf16 %v467, %v463
        %v524 = vpack.c.bf16 %v468, %v464
        %v525 = vpack.c.bf16 %v469, %v465
        %v526 = vpack.c.bf16 %v470, %v466
        %v527 = vpack.c.bf16 %v475, %v471
        %v528 = vpack.c.bf16 %v476, %v472
        %v529 = vpack.c.bf16 %v477, %v473
        %v530 = vpack.c.bf16 %v478, %v474
        %v531 = vpack.c.bf16 %v483, %v479
        %v532 = vpack.c.bf16 %v484, %v480
        %v533 = vpack.c.bf16 %v485, %v481
        %v534 = vpack.c.bf16 %v486, %v482
        %v535 = vpack.c.bf16 %v491, %v487
        %v536 = vpack.c.bf16 %v492, %v488
        %v537 = vpack.c.bf16 %v493, %v489
        %v538 = vpack.c.bf16 %v494, %v490
        %v539 = vpack.c.bf16 %v499, %v495
        %v540 = vpack.c.bf16 %v500, %v496
        %v541 = vpack.c.bf16 %v501, %v497
        %v542 = vpack.c.bf16 %v502, %v498
        %v543 = vpack.c.bf16 %v507, %v503
        %v544 = vpack.c.bf16 %v508, %v504
        %v545 = vpack.c.bf16 %v509, %v505
        %v546 = vpack.c.bf16 %v510, %v506
        %v547 = vpack.c.bf16 %v515, %v511
        %v548 = vpack.c.bf16 %v516, %v512
        %v549 = vpack.c.bf16 %v517, %v513
        %v550 = vpack.c.bf16 %v518, %v514
        %v551 = vld [vmem:[%s292] sm:$0xf]
        %v552 = vld [vmem:[%s292 + $0x4] sm:$0xf]
        %v553 = vld [vmem:[%s292 + $0x8] sm:$0xf]
        %v554 = vld [vmem:[%s292 + $0xc] sm:$0xf]
        %v555 = vld [vmem:[%s292 + $0x10] sm:$0xf]
        %v556 = vld [vmem:[%s292 + $0x14] sm:$0xf]
        %v557 = vld [vmem:[%s292 + $0x18] sm:$0xf]
        %v558 = vld [vmem:[%s292 + $0x1c] sm:$0xf]
        %v559 = vld [vmem:[%s292 + $0x20] sm:$0xf]
        %v560 = vld [vmem:[%s292 + $0x24] sm:$0xf]
        %v561 = vld [vmem:[%s292 + $0x28] sm:$0xf]
        %v562 = vld [vmem:[%s292 + $0x2c] sm:$0xf]
        %v563 = vld [vmem:[%s292 + $0x30] sm:$0xf]
        %v564 = vld [vmem:[%s292 + $0x34] sm:$0xf]
        %v565 = vld [vmem:[%s292 + $0x38] sm:$0xf]
        %v566 = vld [vmem:[%s292 + $0x3c] sm:$0xf]
        %v567 = vld [vmem:[%s292 + $0x40] sm:$0xf]
        %v568 = vld [vmem:[%s292 + $0x44] sm:$0xf]
        %v569 = vld [vmem:[%s292 + $0x48] sm:$0xf]
        %v570 = vld [vmem:[%s292 + $0x4c] sm:$0xf]
        %v571 = vld [vmem:[%s292 + $0x50] sm:$0xf]
        %v572 = vld [vmem:[%s292 + $0x54] sm:$0xf]
        %v573 = vld [vmem:[%s292 + $0x58] sm:$0xf]
        %v574 = vld [vmem:[%s292 + $0x5c] sm:$0xf]
        %v575 = vld [vmem:[%s292 + $0x60] sm:$0xf]
        %v576 = vld [vmem:[%s292 + $0x64] sm:$0xf]
        %v577 = vld [vmem:[%s292 + $0x68] sm:$0xf]
        %v578 = vld [vmem:[%s292 + $0x6c] sm:$0xf]
        %v579 = vld [vmem:[%s292 + $0x70] sm:$0xf]
        %v580 = vld [vmem:[%s292 + $0x74] sm:$0xf]
        %v581 = vld [vmem:[%s292 + $0x78] sm:$0xf]
        %v582 = vld [vmem:[%s292 + $0x7c] sm:$0xf]
        %v583 = vld [vmem:[%s292 + $0x80] sm:$0xf]
        %v584 = vld [vmem:[%s292 + $0x84] sm:$0xf]
        %v585 = vld [vmem:[%s292 + $0x88] sm:$0xf]
        %v586 = vld [vmem:[%s292 + $0x8c] sm:$0xf]
        %v587 = vld [vmem:[%s292 + $0x90] sm:$0xf]
        %v588 = vld [vmem:[%s292 + $0x94] sm:$0xf]
        %v589 = vld [vmem:[%s292 + $0x98] sm:$0xf]
        %v590 = vld [vmem:[%s292 + $0x9c] sm:$0xf]
        %v591 = vld [vmem:[%s292 + $0xa0] sm:$0xf]
        %v592 = vld [vmem:[%s292 + $0xa4] sm:$0xf]
        %v593 = vld [vmem:[%s292 + $0xa8] sm:$0xf]
        %v594 = vld [vmem:[%s292 + $0xac] sm:$0xf]
        %v595 = vld [vmem:[%s292 + $0xb0] sm:$0xf]
        %v596 = vld [vmem:[%s292 + $0xb4] sm:$0xf]
        %v597 = vld [vmem:[%s292 + $0xb8] sm:$0xf]
        %v598 = vld [vmem:[%s292 + $0xbc] sm:$0xf]
        %v599 = vld [vmem:[%s292 + $0xc0] sm:$0xf]
        %v600 = vld [vmem:[%s292 + $0xc4] sm:$0xf]
        %v601 = vld [vmem:[%s292 + $0xc8] sm:$0xf]
        %v602 = vld [vmem:[%s292 + $0xcc] sm:$0xf]
        %v603 = vld [vmem:[%s292 + $0xd0] sm:$0xf]
        %v604 = vld [vmem:[%s292 + $0xd4] sm:$0xf]
        %v605 = vld [vmem:[%s292 + $0xd8] sm:$0xf]
        %v606 = vld [vmem:[%s292 + $0xdc] sm:$0xf]
        %v607 = vld [vmem:[%s292 + $0xe0] sm:$0xf]
        %v608 = vld [vmem:[%s292 + $0xe4] sm:$0xf]
        %v609 = vld [vmem:[%s292 + $0xe8] sm:$0xf]
        %v610 = vld [vmem:[%s292 + $0xec] sm:$0xf]
        %v611 = vld [vmem:[%s292 + $0xf0] sm:$0xf]
        %v612 = vld [vmem:[%s292 + $0xf4] sm:$0xf]
        %v613 = vld [vmem:[%s292 + $0xf8] sm:$0xf]
        %v614 = vld [vmem:[%s292 + $0xfc] sm:$0xf]
        %v615 = vld [vmem:[#allocation2] sm:$0xff]
        %v616 = vld [vmem:[#allocation2 + $0x8] sm:$0xff]
        %v617 = vld [vmem:[#allocation2 + $0x10] sm:$0xff]
        %v618 = vld [vmem:[#allocation2 + $0x18] sm:$0xff]
        %v619 = vld [vmem:[#allocation2 + $0x20] sm:$0xff]
        %v620 = vld [vmem:[#allocation2 + $0x28] sm:$0xff]
        %v621 = vld [vmem:[#allocation2 + $0x30] sm:$0xff]
        %v622 = vld [vmem:[#allocation2 + $0x38] sm:$0xff]
        %v623 = vld [vmem:[#allocation2 + $0x40] sm:$0xff]
        %v624 = vld [vmem:[#allocation2 + $0x48] sm:$0xff]
        %v625 = vld [vmem:[#allocation2 + $0x50] sm:$0xff]
        %v626 = vld [vmem:[#allocation2 + $0x58] sm:$0xff]
        %v627 = vld [vmem:[#allocation2 + $0x60] sm:$0xff]
        %v628 = vld [vmem:[#allocation2 + $0x68] sm:$0xff]
        %v629 = vld [vmem:[#allocation2 + $0x70] sm:$0xff]
        %v630 = vld [vmem:[#allocation2 + $0x78] sm:$0xff]
        %v695 = vunpack.c.l.b16 %v551
        %v696 = vunpack.c.l.b16 %v552
        %v697 = vunpack.c.l.b16 %v553
        %v698 = vunpack.c.l.b16 %v554
        %v699 = vunpack.c.l.b16 %v555
        %v700 = vunpack.c.l.b16 %v556
        %v701 = vunpack.c.l.b16 %v557
        %v702 = vunpack.c.l.b16 %v558
        %v703 = vunpack.c.l.b16 %v559
        %v704 = vunpack.c.l.b16 %v560
        %v705 = vunpack.c.l.b16 %v561
        %v706 = vunpack.c.l.b16 %v562
        %v707 = vunpack.c.l.b16 %v563
        %v708 = vunpack.c.l.b16 %v564
        %v709 = vunpack.c.l.b16 %v565
        %v710 = vunpack.c.l.b16 %v566
        %v711 = vunpack.c.l.b16 %v567
        %v712 = vunpack.c.l.b16 %v568
        %v713 = vunpack.c.l.b16 %v569
        %v714 = vunpack.c.l.b16 %v570
        %v715 = vunpack.c.l.b16 %v571
        %v716 = vunpack.c.l.b16 %v572
        %v717 = vunpack.c.l.b16 %v573
        %v718 = vunpack.c.l.b16 %v574
        %v719 = vunpack.c.l.b16 %v575
        %v720 = vunpack.c.l.b16 %v576
        %v721 = vunpack.c.l.b16 %v577
        %v722 = vunpack.c.l.b16 %v578
        %v723 = vunpack.c.l.b16 %v579
        %v724 = vunpack.c.l.b16 %v580
        %v725 = vunpack.c.l.b16 %v581
        %v726 = vunpack.c.l.b16 %v582
        %v727 = vunpack.c.l.b16 %v583
        %v728 = vunpack.c.l.b16 %v584
        %v729 = vunpack.c.l.b16 %v585
        %v730 = vunpack.c.l.b16 %v586
        %v731 = vunpack.c.l.b16 %v587
        %v732 = vunpack.c.l.b16 %v588
        %v733 = vunpack.c.l.b16 %v589
        %v734 = vunpack.c.l.b16 %v590
        %v735 = vunpack.c.l.b16 %v591
        %v736 = vunpack.c.l.b16 %v592
        %v737 = vunpack.c.l.b16 %v593
        %v738 = vunpack.c.l.b16 %v594
        %v739 = vunpack.c.l.b16 %v595
        %v740 = vunpack.c.l.b16 %v596
        %v741 = vunpack.c.l.b16 %v597
        %v742 = vunpack.c.l.b16 %v598
        %v743 = vunpack.c.l.b16 %v599
        %v744 = vunpack.c.l.b16 %v600
        %v745 = vunpack.c.l.b16 %v601
        %v746 = vunpack.c.l.b16 %v602
        %v747 = vunpack.c.l.b16 %v603
        %v748 = vunpack.c.l.b16 %v604
        %v749 = vunpack.c.l.b16 %v605
        %v750 = vunpack.c.l.b16 %v606
        %v751 = vunpack.c.l.b16 %v607
        %v752 = vunpack.c.l.b16 %v608
        %v753 = vunpack.c.l.b16 %v609
        %v754 = vunpack.c.l.b16 %v610
        %v755 = vunpack.c.l.b16 %v611
        %v756 = vunpack.c.l.b16 %v612
        %v757 = vunpack.c.l.b16 %v613
        %v758 = vunpack.c.l.b16 %v614
        %v759 = vpack.c.b16 %v696, %v695
        %v760 = vpack.c.b16 %v698, %v697
        %v761 = vpack.c.b16 %v700, %v699
        %v762 = vpack.c.b16 %v702, %v701
        %v763 = vpack.c.b16 %v704, %v703
        %v764 = vpack.c.b16 %v706, %v705
        %v765 = vpack.c.b16 %v708, %v707
        %v766 = vpack.c.b16 %v710, %v709
        %v767 = vpack.c.b16 %v712, %v711
        %v768 = vpack.c.b16 %v714, %v713
        %v769 = vpack.c.b16 %v716, %v715
        %v770 = vpack.c.b16 %v718, %v717
        %v771 = vpack.c.b16 %v720, %v719
        %v772 = vpack.c.b16 %v722, %v721
        %v773 = vpack.c.b16 %v724, %v723
        %v774 = vpack.c.b16 %v726, %v725
        %v775 = vpack.c.b16 %v728, %v727
        %v776 = vpack.c.b16 %v730, %v729
        %v777 = vpack.c.b16 %v732, %v731
        %v778 = vpack.c.b16 %v734, %v733
        %v779 = vpack.c.b16 %v736, %v735
        %v780 = vpack.c.b16 %v738, %v737
        %v781 = vpack.c.b16 %v740, %v739
        %v782 = vpack.c.b16 %v742, %v741
        %v783 = vpack.c.b16 %v744, %v743
        %v784 = vpack.c.b16 %v746, %v745
        %v785 = vpack.c.b16 %v748, %v747
        %v786 = vpack.c.b16 %v750, %v749
        %v787 = vpack.c.b16 %v752, %v751
        %v788 = vpack.c.b16 %v754, %v753
        %v789 = vpack.c.b16 %v756, %v755
        %v790 = vpack.c.b16 %v758, %v757
        %823 = vmatpush.bf16.msra.mxu0 %v766
        %824 = vmatpush.bf16.msra.mxu0 %v765
        %825 = vmatpush.bf16.msra.mxu0 %v764
        %826 = vmatpush.bf16.msra.mxu0 %v763
        %827 = vmatpush.bf16.msra.mxu0 %v762
        %828 = vmatpush.bf16.msra.mxu0 %v761
        %829 = vmatpush.bf16.msra.mxu0 %v760
        %830 = vmatpush.bf16.msra.mxu0 %v759
        %831 = vmatmul.bf16.gmra.mxu0 %v519
        %v832 = vpop.f32.mrf.mxu0
        %v833 = vadd.f32 0.0, %v832
        %v834 = vpop.f32.mrf.mxu0
        %v835 = vadd.f32 0.0, %v834
        %836 = vmatmul.bf16.gmra.mxu0 %v523
        %v837 = vpop.f32.mrf.mxu0
        %v838 = vadd.f32 0.0, %v837
        %v839 = vpop.f32.mrf.mxu0
        %v840 = vadd.f32 0.0, %v839
        %841 = vmatmul.bf16.gmra.mxu0 %v527
        %v842 = vpop.f32.mrf.mxu0
        %v843 = vadd.f32 0.0, %v842
        %v844 = vpop.f32.mrf.mxu0
        %v845 = vadd.f32 0.0, %v844
        %846 = vmatmul.bf16.gmra.mxu0 %v531
        %v847 = vpop.f32.mrf.mxu0
        %v848 = vadd.f32 0.0, %v847
        %v849 = vpop.f32.mrf.mxu0
        %v850 = vadd.f32 0.0, %v849
        %851 = vmatmul.bf16.gmra.mxu0 %v535
        %v852 = vpop.f32.mrf.mxu0
        %v853 = vadd.f32 0.0, %v852
        %v854 = vpop.f32.mrf.mxu0
        %v855 = vadd.f32 0.0, %v854
        %856 = vmatmul.bf16.gmra.mxu0 %v539
        %v857 = vpop.f32.mrf.mxu0
        %v858 = vadd.f32 0.0, %v857
        %v859 = vpop.f32.mrf.mxu0
        %v860 = vadd.f32 0.0, %v859
        %861 = vmatmul.bf16.gmra.mxu0 %v543
        %v862 = vpop.f32.mrf.mxu0
        %v863 = vadd.f32 0.0, %v862
        %v864 = vpop.f32.mrf.mxu0
        %v865 = vadd.f32 0.0, %v864
        %866 = vmatmul.bf16.gmra.mxu0 %v547
        %v867 = vpop.f32.mrf.mxu0
        %v868 = vadd.f32 0.0, %v867
        %v869 = vpop.f32.mrf.mxu0
        %v870 = vadd.f32 0.0, %v869
        %871 = vdwg.mxu0
        %872 = vmatpush.bf16.msra.mxu0 %v774
        %873 = vmatpush.bf16.msra.mxu0 %v773
        %874 = vmatpush.bf16.msra.mxu0 %v772
        %875 = vmatpush.bf16.msra.mxu0 %v771
        %876 = vmatpush.bf16.msra.mxu0 %v770
        %877 = vmatpush.bf16.msra.mxu0 %v769
        %878 = vmatpush.bf16.msra.mxu0 %v768
        %879 = vmatpush.bf16.msra.mxu0 %v767
        %880 = vmatmul.bf16.gmra.mxu0 %v520
        %v881 = vpop.f32.mrf.mxu0
        %v882 = vadd.f32 %v833, %v881
        %v883 = vpop.f32.mrf.mxu0
        %v884 = vadd.f32 %v835, %v883
        %885 = vmatmul.bf16.gmra.mxu0 %v524
        %v886 = vpop.f32.mrf.mxu0
        %v887 = vadd.f32 %v838, %v886
        %v888 = vpop.f32.mrf.mxu0
        %v889 = vadd.f32 %v840, %v888
        %890 = vmatmul.bf16.gmra.mxu0 %v528
        %v891 = vpop.f32.mrf.mxu0
        %v892 = vadd.f32 %v843, %v891
        %v893 = vpop.f32.mrf.mxu0
        %v894 = vadd.f32 %v845, %v893
        %895 = vmatmul.bf16.gmra.mxu0 %v532
        %v896 = vpop.f32.mrf.mxu0
        %v897 = vadd.f32 %v848, %v896
        %v898 = vpop.f32.mrf.mxu0
        %v899 = vadd.f32 %v850, %v898
        %900 = vmatmul.bf16.gmra.mxu0 %v536
        %v901 = vpop.f32.mrf.mxu0
        %v902 = vadd.f32 %v853, %v901
        %v903 = vpop.f32.mrf.mxu0
        %v904 = vadd.f32 %v855, %v903
        %905 = vmatmul.bf16.gmra.mxu0 %v540
        %v906 = vpop.f32.mrf.mxu0
        %v907 = vadd.f32 %v858, %v906
        %v908 = vpop.f32.mrf.mxu0
        %v909 = vadd.f32 %v860, %v908
        %910 = vmatmul.bf16.gmra.mxu0 %v544
        %v911 = vpop.f32.mrf.mxu0
        %v912 = vadd.f32 %v863, %v911
        %v913 = vpop.f32.mrf.mxu0
        %v914 = vadd.f32 %v865, %v913
        %915 = vmatmul.bf16.gmra.mxu0 %v548
        %v916 = vpop.f32.mrf.mxu0
        %v917 = vadd.f32 %v868, %v916
        %v918 = vpop.f32.mrf.mxu0
        %v919 = vadd.f32 %v870, %v918
        %920 = vdwg.mxu0
        %921 = vmatpush.bf16.msra.mxu0 %v782
        %922 = vmatpush.bf16.msra.mxu0 %v781
        %923 = vmatpush.bf16.msra.mxu0 %v780
        %924 = vmatpush.bf16.msra.mxu0 %v779
        %925 = vmatpush.bf16.msra.mxu0 %v778
        %926 = vmatpush.bf16.msra.mxu0 %v777
        %927 = vmatpush.bf16.msra.mxu0 %v776
        %928 = vmatpush.bf16.msra.mxu0 %v775
        %929 = vmatmul.bf16.gmra.mxu0 %v521
        %v930 = vpop.f32.mrf.mxu0
        %v931 = vadd.f32 %v882, %v930
        %v932 = vpop.f32.mrf.mxu0
        %v933 = vadd.f32 %v884, %v932
        %934 = vmatmul.bf16.gmra.mxu0 %v525
        %v935 = vpop.f32.mrf.mxu0
        %v936 = vadd.f32 %v887, %v935
        %v937 = vpop.f32.mrf.mxu0
        %v938 = vadd.f32 %v889, %v937
        %939 = vmatmul.bf16.gmra.mxu0 %v529
        %v940 = vpop.f32.mrf.mxu0
        %v941 = vadd.f32 %v892, %v940
        %v942 = vpop.f32.mrf.mxu0
        %v943 = vadd.f32 %v894, %v942
        %944 = vmatmul.bf16.gmra.mxu0 %v533
        %v945 = vpop.f32.mrf.mxu0
        %v946 = vadd.f32 %v897, %v945
        %v947 = vpop.f32.mrf.mxu0
        %v948 = vadd.f32 %v899, %v947
        %949 = vmatmul.bf16.gmra.mxu0 %v537
        %v950 = vpop.f32.mrf.mxu0
        %v951 = vadd.f32 %v902, %v950
        %v952 = vpop.f32.mrf.mxu0
        %v953 = vadd.f32 %v904, %v952
        %954 = vmatmul.bf16.gmra.mxu0 %v541
        %v955 = vpop.f32.mrf.mxu0
        %v956 = vadd.f32 %v907, %v955
        %v957 = vpop.f32.mrf.mxu0
        %v958 = vadd.f32 %v909, %v957
        %959 = vmatmul.bf16.gmra.mxu0 %v545
        %v960 = vpop.f32.mrf.mxu0
        %v961 = vadd.f32 %v912, %v960
        %v962 = vpop.f32.mrf.mxu0
        %v963 = vadd.f32 %v914, %v962
        %964 = vmatmul.bf16.gmra.mxu0 %v549
        %v965 = vpop.f32.mrf.mxu0
        %v966 = vadd.f32 %v917, %v965
        %v967 = vpop.f32.mrf.mxu0
        %v968 = vadd.f32 %v919, %v967
        %969 = vdwg.mxu0
        %970 = vmatpush.bf16.msra.mxu0 %v790
        %971 = vmatpush.bf16.msra.mxu0 %v789
        %972 = vmatpush.bf16.msra.mxu0 %v788
        %973 = vmatpush.bf16.msra.mxu0 %v787
        %974 = vmatpush.bf16.msra.mxu0 %v786
        %975 = vmatpush.bf16.msra.mxu0 %v785
        %976 = vmatpush.bf16.msra.mxu0 %v784
        %977 = vmatpush.bf16.msra.mxu0 %v783
        %978 = vmatmul.bf16.gmra.mxu0 %v522
        %v979 = vpop.f32.mrf.mxu0
        %v980 = vadd.f32 %v931, %v979
        %v981 = vpop.f32.mrf.mxu0
        %v982 = vadd.f32 %v933, %v981
        %983 = vmatmul.bf16.gmra.mxu0 %v526
        %v984 = vpop.f32.mrf.mxu0
        %v985 = vadd.f32 %v936, %v984
        %v986 = vpop.f32.mrf.mxu0
        %v987 = vadd.f32 %v938, %v986
        %988 = vmatmul.bf16.gmra.mxu0 %v530
        %v989 = vpop.f32.mrf.mxu0
        %v990 = vadd.f32 %v941, %v989
        %v991 = vpop.f32.mrf.mxu0
        %v992 = vadd.f32 %v943, %v991
        %993 = vmatmul.bf16.gmra.mxu0 %v534
        %v994 = vpop.f32.mrf.mxu0
        %v995 = vadd.f32 %v946, %v994
        %v996 = vpop.f32.mrf.mxu0
        %v997 = vadd.f32 %v948, %v996
        %998 = vmatmul.bf16.gmra.mxu0 %v538
        %v999 = vpop.f32.mrf.mxu0
        %v1000 = vadd.f32 %v951, %v999
        %v1001 = vpop.f32.mrf.mxu0
        %v1002 = vadd.f32 %v953, %v1001
        %1003 = vmatmul.bf16.gmra.mxu0 %v542
        %v1004 = vpop.f32.mrf.mxu0
        %v1005 = vadd.f32 %v956, %v1004
        %v1006 = vpop.f32.mrf.mxu0
        %v1007 = vadd.f32 %v958, %v1006
        %1008 = vmatmul.bf16.gmra.mxu0 %v546
        %v1009 = vpop.f32.mrf.mxu0
        %v1010 = vadd.f32 %v961, %v1009
        %v1011 = vpop.f32.mrf.mxu0
        %v1012 = vadd.f32 %v963, %v1011
        %1013 = vmatmul.bf16.gmra.mxu0 %v550
        %v1014 = vpop.f32.mrf.mxu0
        %v1015 = vadd.f32 %v966, %v1014
        %v1016 = vpop.f32.mrf.mxu0
        %v1017 = vadd.f32 %v968, %v1016
        %1018 = vdwg.mxu0
        %v1019 = vadd.f32 %v615, %v980
        %v1020 = vadd.f32 %v616, %v982
        %v1021 = vadd.f32 %v617, %v985
        %v1022 = vadd.f32 %v618, %v987
        %v1023 = vadd.f32 %v619, %v990
        %v1024 = vadd.f32 %v620, %v992
        %v1025 = vadd.f32 %v621, %v995
        %v1026 = vadd.f32 %v622, %v997
        %v1027 = vadd.f32 %v623, %v1000
        %v1028 = vadd.f32 %v624, %v1002
        %v1029 = vadd.f32 %v625, %v1005
        %v1030 = vadd.f32 %v626, %v1007
        %v1031 = vadd.f32 %v627, %v1010
        %v1032 = vadd.f32 %v628, %v1012
        %v1033 = vadd.f32 %v629, %v1015
        %v1034 = vadd.f32 %v630, %v1017
        %1035 = vst [vmem:[#allocation2] sm:$0xff] %v1019
        %1036 = vst [vmem:[#allocation2 + $0x8] sm:$0xff] %v1020
        %1037 = vst [vmem:[#allocation2 + $0x10] sm:$0xff] %v1021
        %1038 = vst [vmem:[#allocation2 + $0x18] sm:$0xff] %v1022
        %1039 = vst [vmem:[#allocation2 + $0x20] sm:$0xff] %v1023
        %1040 = vst [vmem:[#allocation2 + $0x28] sm:$0xff] %v1024
        %1041 = vst [vmem:[#allocation2 + $0x30] sm:$0xff] %v1025
        %1042 = vst [vmem:[#allocation2 + $0x38] sm:$0xff] %v1026
        %1043 = vst [vmem:[#allocation2 + $0x40] sm:$0xff] %v1027
        %1044 = vst [vmem:[#allocation2 + $0x48] sm:$0xff] %v1028
        %1045 = vst [vmem:[#allocation2 + $0x50] sm:$0xff] %v1029
        %1046 = vst [vmem:[#allocation2 + $0x58] sm:$0xff] %v1030
        %1047 = vst [vmem:[#allocation2 + $0x60] sm:$0xff] %v1031
        %1048 = vst [vmem:[#allocation2 + $0x68] sm:$0xff] %v1032
        %1049 = vst [vmem:[#allocation2 + $0x70] sm:$0xff] %v1033
        %1050 = vst [vmem:[#allocation2 + $0x78] sm:$0xff] %v1034
        %v1051 = vld [vmem:[#allocation3] sm:$0xff]
        %v1052 = vld [vmem:[#allocation3 + $0x8] sm:$0xff]
        %v1053 = vld [vmem:[#allocation3 + $0x10] sm:$0xff]
        %v1054 = vld [vmem:[#allocation3 + $0x18] sm:$0xff]
        %v1055 = vld [vmem:[#allocation3 + $0x20] sm:$0xff]
        %v1056 = vld [vmem:[#allocation3 + $0x28] sm:$0xff]
        %v1057 = vld [vmem:[#allocation3 + $0x30] sm:$0xff]
        %v1058 = vld [vmem:[#allocation3 + $0x38] sm:$0xff]
        %v1059 = vld [vmem:[#allocation3 + $0x40] sm:$0xff]
        %v1060 = vld [vmem:[#allocation3 + $0x48] sm:$0xff]
        %v1061 = vld [vmem:[#allocation3 + $0x50] sm:$0xff]
        %v1062 = vld [vmem:[#allocation3 + $0x58] sm:$0xff]
        %v1063 = vld [vmem:[#allocation3 + $0x60] sm:$0xff]
        %v1064 = vld [vmem:[#allocation3 + $0x68] sm:$0xff]
        %v1065 = vld [vmem:[#allocation3 + $0x70] sm:$0xff]
        %v1066 = vld [vmem:[#allocation3 + $0x78] sm:$0xff]
        %v1067 = vunpack.c.l.bf16 %v519
        %v1068 = vunpack.c.l.bf16 %v520
        %v1069 = vunpack.c.l.bf16 %v521
        %v1070 = vunpack.c.l.bf16 %v522
        %v1071 = vunpack.c.h.bf16 %v519
        %v1072 = vunpack.c.h.bf16 %v520
        %v1073 = vunpack.c.h.bf16 %v521
        %v1074 = vunpack.c.h.bf16 %v522
        %v1075 = vunpack.c.l.bf16 %v523
        %v1076 = vunpack.c.l.bf16 %v524
        %v1077 = vunpack.c.l.bf16 %v525
        %v1078 = vunpack.c.l.bf16 %v526
        %v1079 = vunpack.c.h.bf16 %v523
        %v1080 = vunpack.c.h.bf16 %v524
        %v1081 = vunpack.c.h.bf16 %v525
        %v1082 = vunpack.c.h.bf16 %v526
        %v1083 = vunpack.c.l.bf16 %v527
        %v1084 = vunpack.c.l.bf16 %v528
        %v1085 = vunpack.c.l.bf16 %v529
        %v1086 = vunpack.c.l.bf16 %v530
        %v1087 = vunpack.c.h.bf16 %v527
        %v1088 = vunpack.c.h.bf16 %v528
        %v1089 = vunpack.c.h.bf16 %v529
        %v1090 = vunpack.c.h.bf16 %v530
        %v1091 = vunpack.c.l.bf16 %v531
        %v1092 = vunpack.c.l.bf16 %v532
        %v1093 = vunpack.c.l.bf16 %v533
        %v1094 = vunpack.c.l.bf16 %v534
        %v1095 = vunpack.c.h.bf16 %v531
        %v1096 = vunpack.c.h.bf16 %v532
        %v1097 = vunpack.c.h.bf16 %v533
        %v1098 = vunpack.c.h.bf16 %v534
        %v1099 = vunpack.c.l.bf16 %v535
        %v1100 = vunpack.c.l.bf16 %v536
        %v1101 = vunpack.c.l.bf16 %v537
        %v1102 = vunpack.c.l.bf16 %v538
        %v1103 = vunpack.c.h.bf16 %v535
        %v1104 = vunpack.c.h.bf16 %v536
        %v1105 = vunpack.c.h.bf16 %v537
        %v1106 = vunpack.c.h.bf16 %v538
        %v1107 = vunpack.c.l.bf16 %v539
        %v1108 = vunpack.c.l.bf16 %v540
        %v1109 = vunpack.c.l.bf16 %v541
        %v1110 = vunpack.c.l.bf16 %v542
        %v1111 = vunpack.c.h.bf16 %v539
        %v1112 = vunpack.c.h.bf16 %v540
        %v1113 = vunpack.c.h.bf16 %v541
        %v1114 = vunpack.c.h.bf16 %v542
        %v1115 = vunpack.c.l.bf16 %v543
        %v1116 = vunpack.c.l.bf16 %v544
        %v1117 = vunpack.c.l.bf16 %v545
        %v1118 = vunpack.c.l.bf16 %v546
        %v1119 = vunpack.c.h.bf16 %v543
        %v1120 = vunpack.c.h.bf16 %v544
        %v1121 = vunpack.c.h.bf16 %v545
        %v1122 = vunpack.c.h.bf16 %v546
        %v1123 = vunpack.c.l.bf16 %v547
        %v1124 = vunpack.c.l.bf16 %v548
        %v1125 = vunpack.c.l.bf16 %v549
        %v1126 = vunpack.c.l.bf16 %v550
        %v1127 = vunpack.c.h.bf16 %v547
        %v1128 = vunpack.c.h.bf16 %v548
        %v1129 = vunpack.c.h.bf16 %v549
        %v1130 = vunpack.c.h.bf16 %v550
        %v1131 = vadd.f32 %v1067, %v1068
        %v1132 = vadd.f32 %v1131, %v1069
        %v1133 = vadd.f32 %v1132, %v1070
        %1134 = vadd.xlane.f32.xlu0 %v1133
        %v1135 = vpop.xlane.xlu0 %1134
        %v1136 = vadd.f32 %v1071, %v1072
        %v1137 = vadd.f32 %v1136, %v1073
        %v1138 = vadd.f32 %v1137, %v1074
        %1139 = vadd.xlane.f32.xlu0 %v1138
        %v1140 = vpop.xlane.xlu0 %1139
        %v1141 = vadd.f32 %v1075, %v1076
        %v1142 = vadd.f32 %v1141, %v1077
        %v1143 = vadd.f32 %v1142, %v1078
        %1144 = vadd.xlane.f32.xlu0 %v1143
        %v1145 = vpop.xlane.xlu0 %1144
        %v1146 = vadd.f32 %v1079, %v1080
        %v1147 = vadd.f32 %v1146, %v1081
        %v1148 = vadd.f32 %v1147, %v1082
        %1149 = vadd.xlane.f32.xlu0 %v1148
        %v1150 = vpop.xlane.xlu0 %1149
        %v1151 = vadd.f32 %v1083, %v1084
        %v1152 = vadd.f32 %v1151, %v1085
        %v1153 = vadd.f32 %v1152, %v1086
        %1154 = vadd.xlane.f32.xlu0 %v1153
        %v1155 = vpop.xlane.xlu0 %1154
        %v1156 = vadd.f32 %v1087, %v1088
        %v1157 = vadd.f32 %v1156, %v1089
        %v1158 = vadd.f32 %v1157, %v1090
        %1159 = vadd.xlane.f32.xlu0 %v1158
        %v1160 = vpop.xlane.xlu0 %1159
        %v1161 = vadd.f32 %v1091, %v1092
        %v1162 = vadd.f32 %v1161, %v1093
        %v1163 = vadd.f32 %v1162, %v1094
        %1164 = vadd.xlane.f32.xlu0 %v1163
        %v1165 = vpop.xlane.xlu0 %1164
        %v1166 = vadd.f32 %v1095, %v1096
        %v1167 = vadd.f32 %v1166, %v1097
        %v1168 = vadd.f32 %v1167, %v1098
        %1169 = vadd.xlane.f32.xlu0 %v1168
        %v1170 = vpop.xlane.xlu0 %1169
        %v1171 = vadd.f32 %v1099, %v1100
        %v1172 = vadd.f32 %v1171, %v1101
        %v1173 = vadd.f32 %v1172, %v1102
        %1174 = vadd.xlane.f32.xlu0 %v1173
        %v1175 = vpop.xlane.xlu0 %1174
        %v1176 = vadd.f32 %v1103, %v1104
        %v1177 = vadd.f32 %v1176, %v1105
        %v1178 = vadd.f32 %v1177, %v1106
        %1179 = vadd.xlane.f32.xlu0 %v1178
        %v1180 = vpop.xlane.xlu0 %1179
        %v1181 = vadd.f32 %v1107, %v1108
        %v1182 = vadd.f32 %v1181, %v1109
        %v1183 = vadd.f32 %v1182, %v1110
        %1184 = vadd.xlane.f32.xlu0 %v1183
        %v1185 = vpop.xlane.xlu0 %1184
        %v1186 = vadd.f32 %v1111, %v1112
        %v1187 = vadd.f32 %v1186, %v1113
        %v1188 = vadd.f32 %v1187, %v1114
        %1189 = vadd.xlane.f32.xlu0 %v1188
        %v1190 = vpop.xlane.xlu0 %1189
        %v1191 = vadd.f32 %v1115, %v1116
        %v1192 = vadd.f32 %v1191, %v1117
        %v1193 = vadd.f32 %v1192, %v1118
        %1194 = vadd.xlane.f32.xlu0 %v1193
        %v1195 = vpop.xlane.xlu0 %1194
        %v1196 = vadd.f32 %v1119, %v1120
        %v1197 = vadd.f32 %v1196, %v1121
        %v1198 = vadd.f32 %v1197, %v1122
        %1199 = vadd.xlane.f32.xlu0 %v1198
        %v1200 = vpop.xlane.xlu0 %1199
        %v1201 = vadd.f32 %v1123, %v1124
        %v1202 = vadd.f32 %v1201, %v1125
        %v1203 = vadd.f32 %v1202, %v1126
        %1204 = vadd.xlane.f32.xlu0 %v1203
        %v1205 = vpop.xlane.xlu0 %1204
        %v1206 = vadd.f32 %v1127, %v1128
        %v1207 = vadd.f32 %v1206, %v1129
        %v1208 = vadd.f32 %v1207, %v1130
        %1209 = vadd.xlane.f32.xlu0 %v1208
        %v1210 = vpop.xlane.xlu0 %1209
        %v1211 = vadd.f32 %v1051, %v1135
        %v1212 = vadd.f32 %v1052, %v1140
        %v1213 = vadd.f32 %v1053, %v1145
        %v1214 = vadd.f32 %v1054, %v1150
        %v1215 = vadd.f32 %v1055, %v1155
        %v1216 = vadd.f32 %v1056, %v1160
        %v1217 = vadd.f32 %v1057, %v1165
        %v1218 = vadd.f32 %v1058, %v1170
        %v1219 = vadd.f32 %v1059, %v1175
        %v1220 = vadd.f32 %v1060, %v1180
        %v1221 = vadd.f32 %v1061, %v1185
        %v1222 = vadd.f32 %v1062, %v1190
        %v1223 = vadd.f32 %v1063, %v1195
        %v1224 = vadd.f32 %v1064, %v1200
        %v1225 = vadd.f32 %v1065, %v1205
        %v1226 = vadd.f32 %v1066, %v1210
        %vm1227 = vcmask 7168
        %1228 = vst.msk [vmem:[#allocation3] sm:$0xff] %vm1227, %v1211
        %1229 = vst.msk [vmem:[#allocation3 + $0x8] sm:$0xff] %vm1227, %v1212
        %1230 = vst.msk [vmem:[#allocation3 + $0x10] sm:$0xff] %vm1227, %v1213
        %1231 = vst.msk [vmem:[#allocation3 + $0x18] sm:$0xff] %vm1227, %v1214
        %1232 = vst.msk [vmem:[#allocation3 + $0x20] sm:$0xff] %vm1227, %v1215
        %1233 = vst.msk [vmem:[#allocation3 + $0x28] sm:$0xff] %vm1227, %v1216
        %1234 = vst.msk [vmem:[#allocation3 + $0x30] sm:$0xff] %vm1227, %v1217
        %1235 = vst.msk [vmem:[#allocation3 + $0x38] sm:$0xff] %vm1227, %v1218
        %1236 = vst.msk [vmem:[#allocation3 + $0x40] sm:$0xff] %vm1227, %v1219
        %1237 = vst.msk [vmem:[#allocation3 + $0x48] sm:$0xff] %vm1227, %v1220
        %1238 = vst.msk [vmem:[#allocation3 + $0x50] sm:$0xff] %vm1227, %v1221
        %1239 = vst.msk [vmem:[#allocation3 + $0x58] sm:$0xff] %vm1227, %v1222
        %1240 = vst.msk [vmem:[#allocation3 + $0x60] sm:$0xff] %vm1227, %v1223
        %1241 = vst.msk [vmem:[#allocation3 + $0x68] sm:$0xff] %vm1227, %v1224
        %1242 = vst.msk [vmem:[#allocation3 + $0x70] sm:$0xff] %vm1227, %v1225
        %1243 = vst.msk [vmem:[#allocation3 + $0x78] sm:$0xff] %vm1227, %v1226
        %p1244 = scmp.eq.s32.totalorder %s30, 1
        // Predicated region
        $region57: #{tpu_custom_call.1} parent=35 // pred_check
          %p1245 = pneg %p1244
        $region58: #{tpu_custom_call.1} parent=35 // pred_check_branch
          %1247 = sbr.rel (%p1245) target = $region60
        $region59: #{tpu_custom_call.1} parent=35 // pred_region
          %v1248 = vld [vmem:[#allocation3] sm:$0xff]
          %v1249 = vld [vmem:[#allocation3 + $0x8] sm:$0xff]
          %v1250 = vld [vmem:[#allocation3 + $0x10] sm:$0xff]
          %v1251 = vld [vmem:[#allocation3 + $0x18] sm:$0xff]
          %v1252 = vld [vmem:[#allocation3 + $0x20] sm:$0xff]
          %v1253 = vld [vmem:[#allocation3 + $0x28] sm:$0xff]
          %v1254 = vld [vmem:[#allocation3 + $0x30] sm:$0xff]
          %v1255 = vld [vmem:[#allocation3 + $0x38] sm:$0xff]
          %v1256 = vld [vmem:[#allocation3 + $0x40] sm:$0xff]
          %v1257 = vld [vmem:[#allocation3 + $0x48] sm:$0xff]
          %v1258 = vld [vmem:[#allocation3 + $0x50] sm:$0xff]
          %v1259 = vld [vmem:[#allocation3 + $0x58] sm:$0xff]
          %v1260 = vld [vmem:[#allocation3 + $0x60] sm:$0xff]
          %v1261 = vld [vmem:[#allocation3 + $0x68] sm:$0xff]
          %v1262 = vld [vmem:[#allocation3 + $0x70] sm:$0xff]
          %v1263 = vld [vmem:[#allocation3 + $0x78] sm:$0xff]
          %v1264 = vmax.f32 %v1248, 1.0
          %v1265 = vmax.f32 %v1249, 1.0
          %v1266 = vmax.f32 %v1250, 1.0
          %v1267 = vmax.f32 %v1251, 1.0
          %v1268 = vmax.f32 %v1252, 1.0
          %v1269 = vmax.f32 %v1253, 1.0
          %v1270 = vmax.f32 %v1254, 1.0
          %v1271 = vmax.f32 %v1255, 1.0
          %v1272 = vmax.f32 %v1256, 1.0
          %v1273 = vmax.f32 %v1257, 1.0
          %v1274 = vmax.f32 %v1258, 1.0
          %v1275 = vmax.f32 %v1259, 1.0
          %v1276 = vmax.f32 %v1260, 1.0
          %v1277 = vmax.f32 %v1261, 1.0
          %v1278 = vmax.f32 %v1262, 1.0
          %v1279 = vmax.f32 %v1263, 1.0
          %v1280 = vld [vmem:[#allocation2] sm:$0xff]
          %v1281 = vld [vmem:[#allocation2 + $0x8] sm:$0xff]
          %v1282 = vld [vmem:[#allocation2 + $0x10] sm:$0xff]
          %v1283 = vld [vmem:[#allocation2 + $0x18] sm:$0xff]
          %v1284 = vld [vmem:[#allocation2 + $0x20] sm:$0xff]
          %v1285 = vld [vmem:[#allocation2 + $0x28] sm:$0xff]
          %v1286 = vld [vmem:[#allocation2 + $0x30] sm:$0xff]
          %v1287 = vld [vmem:[#allocation2 + $0x38] sm:$0xff]
          %v1288 = vld [vmem:[#allocation2 + $0x40] sm:$0xff]
          %v1289 = vld [vmem:[#allocation2 + $0x48] sm:$0xff]
          %v1290 = vld [vmem:[#allocation2 + $0x50] sm:$0xff]
          %v1291 = vld [vmem:[#allocation2 + $0x58] sm:$0xff]
          %v1292 = vld [vmem:[#allocation2 + $0x60] sm:$0xff]
          %v1293 = vld [vmem:[#allocation2 + $0x68] sm:$0xff]
          %v1294 = vld [vmem:[#allocation2 + $0x70] sm:$0xff]
          %v1295 = vld [vmem:[#allocation2 + $0x78] sm:$0xff]
          %1297 = vset.pattern.permute.xlu0 0
          %1298 = vperm.xlu0 %1297, %v1264
          %v1299 = vpop.permute.xlu0 %1298
          %1302 = vset.pattern.permute.xlu0 0
          %1303 = vperm.xlu0 %1302, %v1265
          %v1304 = vpop.permute.xlu0 %1303
          %1307 = vset.pattern.permute.xlu0 0
          %1308 = vperm.xlu0 %1307, %v1266
          %v1309 = vpop.permute.xlu0 %1308
          %1312 = vset.pattern.permute.xlu0 0
          %1313 = vperm.xlu0 %1312, %v1267
          %v1314 = vpop.permute.xlu0 %1313
          %1317 = vset.pattern.permute.xlu0 0
          %1318 = vperm.xlu0 %1317, %v1268
          %v1319 = vpop.permute.xlu0 %1318
          %1322 = vset.pattern.permute.xlu0 0
          %1323 = vperm.xlu0 %1322, %v1269
          %v1324 = vpop.permute.xlu0 %1323
          %1327 = vset.pattern.permute.xlu0 0
          %1328 = vperm.xlu0 %1327, %v1270
          %v1329 = vpop.permute.xlu0 %1328
          %1332 = vset.pattern.permute.xlu0 0
          %1333 = vperm.xlu0 %1332, %v1271
          %v1334 = vpop.permute.xlu0 %1333
          %1337 = vset.pattern.permute.xlu0 0
          %1338 = vperm.xlu0 %1337, %v1272
          %v1339 = vpop.permute.xlu0 %1338
          %1342 = vset.pattern.permute.xlu0 0
          %1343 = vperm.xlu0 %1342, %v1273
          %v1344 = vpop.permute.xlu0 %1343
          %1347 = vset.pattern.permute.xlu0 0
          %1348 = vperm.xlu0 %1347, %v1274
          %v1349 = vpop.permute.xlu0 %1348
          %1352 = vset.pattern.permute.xlu0 0
          %1353 = vperm.xlu0 %1352, %v1275
          %v1354 = vpop.permute.xlu0 %1353
          %1357 = vset.pattern.permute.xlu0 0
          %1358 = vperm.xlu0 %1357, %v1276
          %v1359 = vpop.permute.xlu0 %1358
          %1362 = vset.pattern.permute.xlu0 0
          %1363 = vperm.xlu0 %1362, %v1277
          %v1364 = vpop.permute.xlu0 %1363
          %1367 = vset.pattern.permute.xlu0 0
          %1368 = vperm.xlu0 %1367, %v1278
          %v1369 = vpop.permute.xlu0 %1368
          %1372 = vset.pattern.permute.xlu0 0
          %1373 = vperm.xlu0 %1372, %v1279
          %v1374 = vpop.permute.xlu0 %1373
          %v1376 = vrcp.pop %v1299
          %v1377 = vmul.f32 %v1299, %v1376
          %v1378 = vsub.f32 1.0, %v1377
          %v1379 = vmul.f32 %v1376, %v1378
          %v1380 = vadd.f32 %v1376, %v1379
          %vm1381 = vweird.f32 %v1299
          %vm1382 = vweird.f32 %v1376
          %vm1383 = vmor %vm1381, %vm1382
          %v1384 = vsel %vm1383, %v1376, %v1380
          %v1385 = vand.u32 2147483647, %v1299
          %vm1386 = vcmp.eq.f32.partialorder %v1385, 8.507059e+37
          %v1387 = vand.u32 %v1299, 2147483648
          %v1388 = vor.u32 1.1754944e-38, %v1387
          %v1389 = vsel %vm1386, %v1388, %v1384
          %v1390 = vmul.f32 %v1280, %v1389
          %v1391 = vrcp.pop %v1304
          %v1392 = vmul.f32 %v1304, %v1391
          %v1393 = vsub.f32 1.0, %v1392
          %v1394 = vmul.f32 %v1391, %v1393
          %v1395 = vadd.f32 %v1391, %v1394
          %vm1396 = vweird.f32 %v1304
          %vm1397 = vweird.f32 %v1391
          %vm1398 = vmor %vm1396, %vm1397
          %v1399 = vsel %vm1398, %v1391, %v1395
          %v1400 = vand.u32 2147483647, %v1304
          %vm1401 = vcmp.eq.f32.partialorder %v1400, 8.507059e+37
          %v1402 = vand.u32 %v1304, 2147483648
          %v1403 = vor.u32 1.1754944e-38, %v1402
          %v1404 = vsel %vm1401, %v1403, %v1399
          %v1405 = vmul.f32 %v1281, %v1404
          %v1406 = vrcp.pop %v1309
          %v1407 = vmul.f32 %v1309, %v1406
          %v1408 = vsub.f32 1.0, %v1407
          %v1409 = vmul.f32 %v1406, %v1408
          %v1410 = vadd.f32 %v1406, %v1409
          %vm1411 = vweird.f32 %v1309
          %vm1412 = vweird.f32 %v1406
          %vm1413 = vmor %vm1411, %vm1412
          %v1414 = vsel %vm1413, %v1406, %v1410
          %v1415 = vand.u32 2147483647, %v1309
          %vm1416 = vcmp.eq.f32.partialorder %v1415, 8.507059e+37
          %v1417 = vand.u32 %v1309, 2147483648
          %v1418 = vor.u32 1.1754944e-38, %v1417
          %v1419 = vsel %vm1416, %v1418, %v1414
          %v1420 = vmul.f32 %v1282, %v1419
          %v1421 = vrcp.pop %v1314
          %v1422 = vmul.f32 %v1314, %v1421
          %v1423 = vsub.f32 1.0, %v1422
          %v1424 = vmul.f32 %v1421, %v1423
          %v1425 = vadd.f32 %v1421, %v1424
          %vm1426 = vweird.f32 %v1314
          %vm1427 = vweird.f32 %v1421
          %vm1428 = vmor %vm1426, %vm1427
          %v1429 = vsel %vm1428, %v1421, %v1425
          %v1430 = vand.u32 2147483647, %v1314
          %vm1431 = vcmp.eq.f32.partialorder %v1430, 8.507059e+37
          %v1432 = vand.u32 %v1314, 2147483648
          %v1433 = vor.u32 1.1754944e-38, %v1432
          %v1434 = vsel %vm1431, %v1433, %v1429
          %v1435 = vmul.f32 %v1283, %v1434
          %v1436 = vrcp.pop %v1319
          %v1437 = vmul.f32 %v1319, %v1436
          %v1438 = vsub.f32 1.0, %v1437
          %v1439 = vmul.f32 %v1436, %v1438
          %v1440 = vadd.f32 %v1436, %v1439
          %vm1441 = vweird.f32 %v1319
          %vm1442 = vweird.f32 %v1436
          %vm1443 = vmor %vm1441, %vm1442
          %v1444 = vsel %vm1443, %v1436, %v1440
          %v1445 = vand.u32 2147483647, %v1319
          %vm1446 = vcmp.eq.f32.partialorder %v1445, 8.507059e+37
          %v1447 = vand.u32 %v1319, 2147483648
          %v1448 = vor.u32 1.1754944e-38, %v1447
          %v1449 = vsel %vm1446, %v1448, %v1444
          %v1450 = vmul.f32 %v1284, %v1449
          %v1451 = vrcp.pop %v1324
          %v1452 = vmul.f32 %v1324, %v1451
          %v1453 = vsub.f32 1.0, %v1452
          %v1454 = vmul.f32 %v1451, %v1453
          %v1455 = vadd.f32 %v1451, %v1454
          %vm1456 = vweird.f32 %v1324
          %vm1457 = vweird.f32 %v1451
          %vm1458 = vmor %vm1456, %vm1457
          %v1459 = vsel %vm1458, %v1451, %v1455
          %v1460 = vand.u32 2147483647, %v1324
          %vm1461 = vcmp.eq.f32.partialorder %v1460, 8.507059e+37
          %v1462 = vand.u32 %v1324, 2147483648
          %v1463 = vor.u32 1.1754944e-38, %v1462
          %v1464 = vsel %vm1461, %v1463, %v1459
          %v1465 = vmul.f32 %v1285, %v1464
          %v1466 = vrcp.pop %v1329
          %v1467 = vmul.f32 %v1329, %v1466
          %v1468 = vsub.f32 1.0, %v1467
          %v1469 = vmul.f32 %v1466, %v1468
          %v1470 = vadd.f32 %v1466, %v1469
          %vm1471 = vweird.f32 %v1329
          %vm1472 = vweird.f32 %v1466
          %vm1473 = vmor %vm1471, %vm1472
          %v1474 = vsel %vm1473, %v1466, %v1470
          %v1475 = vand.u32 2147483647, %v1329
          %vm1476 = vcmp.eq.f32.partialorder %v1475, 8.507059e+37
          %v1477 = vand.u32 %v1329, 2147483648
          %v1478 = vor.u32 1.1754944e-38, %v1477
          %v1479 = vsel %vm1476, %v1478, %v1474
          %v1480 = vmul.f32 %v1286, %v1479
          %v1481 = vrcp.pop %v1334
          %v1482 = vmul.f32 %v1334, %v1481
          %v1483 = vsub.f32 1.0, %v1482
          %v1484 = vmul.f32 %v1481, %v1483
          %v1485 = vadd.f32 %v1481, %v1484
          %vm1486 = vweird.f32 %v1334
          %vm1487 = vweird.f32 %v1481
          %vm1488 = vmor %vm1486, %vm1487
          %v1489 = vsel %vm1488, %v1481, %v1485
          %v1490 = vand.u32 2147483647, %v1334
          %vm1491 = vcmp.eq.f32.partialorder %v1490, 8.507059e+37
          %v1492 = vand.u32 %v1334, 2147483648
          %v1493 = vor.u32 1.1754944e-38, %v1492
          %v1494 = vsel %vm1491, %v1493, %v1489
          %v1495 = vmul.f32 %v1287, %v1494
          %v1496 = vrcp.pop %v1339
          %v1497 = vmul.f32 %v1339, %v1496
          %v1498 = vsub.f32 1.0, %v1497
          %v1499 = vmul.f32 %v1496, %v1498
          %v1500 = vadd.f32 %v1496, %v1499
          %vm1501 = vweird.f32 %v1339
          %vm1502 = vweird.f32 %v1496
          %vm1503 = vmor %vm1501, %vm1502
          %v1504 = vsel %vm1503, %v1496, %v1500
          %v1505 = vand.u32 2147483647, %v1339
          %vm1506 = vcmp.eq.f32.partialorder %v1505, 8.507059e+37
          %v1507 = vand.u32 %v1339, 2147483648
          %v1508 = vor.u32 1.1754944e-38, %v1507
          %v1509 = vsel %vm1506, %v1508, %v1504
          %v1510 = vmul.f32 %v1288, %v1509
          %v1511 = vrcp.pop %v1344
          %v1512 = vmul.f32 %v1344, %v1511
          %v1513 = vsub.f32 1.0, %v1512
          %v1514 = vmul.f32 %v1511, %v1513
          %v1515 = vadd.f32 %v1511, %v1514
          %vm1516 = vweird.f32 %v1344
          %vm1517 = vweird.f32 %v1511
          %vm1518 = vmor %vm1516, %vm1517
          %v1519 = vsel %vm1518, %v1511, %v1515
          %v1520 = vand.u32 2147483647, %v1344
          %vm1521 = vcmp.eq.f32.partialorder %v1520, 8.507059e+37
          %v1522 = vand.u32 %v1344, 2147483648
          %v1523 = vor.u32 1.1754944e-38, %v1522
          %v1524 = vsel %vm1521, %v1523, %v1519
          %v1525 = vmul.f32 %v1289, %v1524
          %v1526 = vrcp.pop %v1349
          %v1527 = vmul.f32 %v1349, %v1526
          %v1528 = vsub.f32 1.0, %v1527
          %v1529 = vmul.f32 %v1526, %v1528
          %v1530 = vadd.f32 %v1526, %v1529
          %vm1531 = vweird.f32 %v1349
          %vm1532 = vweird.f32 %v1526
          %vm1533 = vmor %vm1531, %vm1532
          %v1534 = vsel %vm1533, %v1526, %v1530
          %v1535 = vand.u32 2147483647, %v1349
          %vm1536 = vcmp.eq.f32.partialorder %v1535, 8.507059e+37
          %v1537 = vand.u32 %v1349, 2147483648
          %v1538 = vor.u32 1.1754944e-38, %v1537
          %v1539 = vsel %vm1536, %v1538, %v1534
          %v1540 = vmul.f32 %v1290, %v1539
          %v1541 = vrcp.pop %v1354
          %v1542 = vmul.f32 %v1354, %v1541
          %v1543 = vsub.f32 1.0, %v1542
          %v1544 = vmul.f32 %v1541, %v1543
          %v1545 = vadd.f32 %v1541, %v1544
          %vm1546 = vweird.f32 %v1354
          %vm1547 = vweird.f32 %v1541
          %vm1548 = vmor %vm1546, %vm1547
          %v1549 = vsel %vm1548, %v1541, %v1545
          %v1550 = vand.u32 2147483647, %v1354
          %vm1551 = vcmp.eq.f32.partialorder %v1550, 8.507059e+37
          %v1552 = vand.u32 %v1354, 2147483648
          %v1553 = vor.u32 1.1754944e-38, %v1552
          %v1554 = vsel %vm1551, %v1553, %v1549
          %v1555 = vmul.f32 %v1291, %v1554
          %v1556 = vrcp.pop %v1359
          %v1557 = vmul.f32 %v1359, %v1556
          %v1558 = vsub.f32 1.0, %v1557
          %v1559 = vmul.f32 %v1556, %v1558
          %v1560 = vadd.f32 %v1556, %v1559
          %vm1561 = vweird.f32 %v1359
          %vm1562 = vweird.f32 %v1556
          %vm1563 = vmor %vm1561, %vm1562
          %v1564 = vsel %vm1563, %v1556, %v1560
          %v1565 = vand.u32 2147483647, %v1359
          %vm1566 = vcmp.eq.f32.partialorder %v1565, 8.507059e+37
          %v1567 = vand.u32 %v1359, 2147483648
          %v1568 = vor.u32 1.1754944e-38, %v1567
          %v1569 = vsel %vm1566, %v1568, %v1564
          %v1570 = vmul.f32 %v1292, %v1569
          %v1571 = vrcp.pop %v1364
          %v1572 = vmul.f32 %v1364, %v1571
          %v1573 = vsub.f32 1.0, %v1572
          %v1574 = vmul.f32 %v1571, %v1573
          %v1575 = vadd.f32 %v1571, %v1574
          %vm1576 = vweird.f32 %v1364
          %vm1577 = vweird.f32 %v1571
          %vm1578 = vmor %vm1576, %vm1577
          %v1579 = vsel %vm1578, %v1571, %v1575
          %v1580 = vand.u32 2147483647, %v1364
          %vm1581 = vcmp.eq.f32.partialorder %v1580, 8.507059e+37
          %v1582 = vand.u32 %v1364, 2147483648
          %v1583 = vor.u32 1.1754944e-38, %v1582
          %v1584 = vsel %vm1581, %v1583, %v1579
          %v1585 = vmul.f32 %v1293, %v1584
          %v1586 = vrcp.pop %v1369
          %v1587 = vmul.f32 %v1369, %v1586
          %v1588 = vsub.f32 1.0, %v1587
          %v1589 = vmul.f32 %v1586, %v1588
          %v1590 = vadd.f32 %v1586, %v1589
          %vm1591 = vweird.f32 %v1369
          %vm1592 = vweird.f32 %v1586
          %vm1593 = vmor %vm1591, %vm1592
          %v1594 = vsel %vm1593, %v1586, %v1590
          %v1595 = vand.u32 2147483647, %v1369
          %vm1596 = vcmp.eq.f32.partialorder %v1595, 8.507059e+37
          %v1597 = vand.u32 %v1369, 2147483648
          %v1598 = vor.u32 1.1754944e-38, %v1597
          %v1599 = vsel %vm1596, %v1598, %v1594
          %v1600 = vmul.f32 %v1294, %v1599
          %v1601 = vrcp.pop %v1374
          %v1602 = vmul.f32 %v1374, %v1601
          %v1603 = vsub.f32 1.0, %v1602
          %v1604 = vmul.f32 %v1601, %v1603
          %v1605 = vadd.f32 %v1601, %v1604
          %vm1606 = vweird.f32 %v1374
          %vm1607 = vweird.f32 %v1601
          %vm1608 = vmor %vm1606, %vm1607
          %v1609 = vsel %vm1608, %v1601, %v1605
          %v1610 = vand.u32 2147483647, %v1374
          %vm1611 = vcmp.eq.f32.partialorder %v1610, 8.507059e+37
          %v1612 = vand.u32 %v1374, 2147483648
          %v1613 = vor.u32 1.1754944e-38, %v1612
          %v1614 = vsel %vm1611, %v1613, %v1609
          %v1615 = vmul.f32 %v1295, %v1614
          %v1616 = vpack.c.bf16 %v1390, %v1390
          %v1617 = vpack.c.bf16 %v1405, %v1405
          %v1618 = vpack.c.bf16 %v1420, %v1420
          %v1619 = vpack.c.bf16 %v1435, %v1435
          %v1620 = vpack.c.bf16 %v1450, %v1450
          %v1621 = vpack.c.bf16 %v1465, %v1465
          %v1622 = vpack.c.bf16 %v1480, %v1480
          %v1623 = vpack.c.bf16 %v1495, %v1495
          %v1624 = vpack.c.bf16 %v1510, %v1510
          %v1625 = vpack.c.bf16 %v1525, %v1525
          %v1626 = vpack.c.bf16 %v1540, %v1540
          %v1627 = vpack.c.bf16 %v1555, %v1555
          %v1628 = vpack.c.bf16 %v1570, %v1570
          %v1629 = vpack.c.bf16 %v1585, %v1585
          %v1630 = vpack.c.bf16 %v1600, %v1600
          %v1631 = vpack.c.bf16 %v1615, %v1615
          %v1632 = vld [vmem:[%s272] sm:$0xf]
          %v1633 = vld [vmem:[%s272 + $0x4] sm:$0xf]
          %v1634 = vld [vmem:[%s272 + $0x8] sm:$0xf]
          %v1635 = vld [vmem:[%s272 + $0xc] sm:$0xf]
          %v1636 = vld [vmem:[%s272 + $0x10] sm:$0xf]
          %v1637 = vld [vmem:[%s272 + $0x14] sm:$0xf]
          %v1638 = vld [vmem:[%s272 + $0x18] sm:$0xf]
          %v1639 = vld [vmem:[%s272 + $0x1c] sm:$0xf]
          %v1640 = vld [vmem:[%s272 + $0x20] sm:$0xf]
          %v1641 = vld [vmem:[%s272 + $0x24] sm:$0xf]
          %v1642 = vld [vmem:[%s272 + $0x28] sm:$0xf]
          %v1643 = vld [vmem:[%s272 + $0x2c] sm:$0xf]
          %v1644 = vld [vmem:[%s272 + $0x30] sm:$0xf]
          %v1645 = vld [vmem:[%s272 + $0x34] sm:$0xf]
          %v1646 = vld [vmem:[%s272 + $0x38] sm:$0xf]
          %v1647 = vld [vmem:[%s272 + $0x3c] sm:$0xf]
          %v1664 = vunpack.c.l.b16 %v1632
          %v1665 = vunpack.c.l.b16 %v1633
          %v1666 = vunpack.c.l.b16 %v1634
          %v1667 = vunpack.c.l.b16 %v1635
          %v1668 = vunpack.c.l.b16 %v1636
          %v1669 = vunpack.c.l.b16 %v1637
          %v1670 = vunpack.c.l.b16 %v1638
          %v1671 = vunpack.c.l.b16 %v1639
          %v1672 = vunpack.c.l.b16 %v1640
          %v1673 = vunpack.c.l.b16 %v1641
          %v1674 = vunpack.c.l.b16 %v1642
          %v1675 = vunpack.c.l.b16 %v1643
          %v1676 = vunpack.c.l.b16 %v1644
          %v1677 = vunpack.c.l.b16 %v1645
          %v1678 = vunpack.c.l.b16 %v1646
          %v1679 = vunpack.c.l.b16 %v1647
          %v1680 = vpack.c.b16 %v1665, %v1664
          %v1681 = vpack.c.b16 %v1667, %v1666
          %v1682 = vpack.c.b16 %v1669, %v1668
          %v1683 = vpack.c.b16 %v1671, %v1670
          %v1684 = vpack.c.b16 %v1673, %v1672
          %v1685 = vpack.c.b16 %v1675, %v1674
          %v1686 = vpack.c.b16 %v1677, %v1676
          %v1687 = vpack.c.b16 %v1679, %v1678
          %v1712 = vunpack.c.l.b16 %v1616
          %v1713 = vunpack.c.l.b16 %v1617
          %v1714 = vunpack.c.l.b16 %v1618
          %v1715 = vunpack.c.l.b16 %v1619
          %v1716 = vunpack.c.l.b16 %v1620
          %v1717 = vunpack.c.l.b16 %v1621
          %v1718 = vunpack.c.l.b16 %v1622
          %v1719 = vunpack.c.l.b16 %v1623
          %v1720 = vunpack.c.l.b16 %v1624
          %v1721 = vunpack.c.l.b16 %v1625
          %v1722 = vunpack.c.l.b16 %v1626
          %v1723 = vunpack.c.l.b16 %v1627
          %v1724 = vunpack.c.l.b16 %v1628
          %v1725 = vunpack.c.l.b16 %v1629
          %v1726 = vunpack.c.l.b16 %v1630
          %v1727 = vunpack.c.l.b16 %v1631
          %v1728 = vpack.c.b16 %v1713, %v1712
          %v1729 = vpack.c.b16 %v1715, %v1714
          %v1730 = vpack.c.b16 %v1717, %v1716
          %v1731 = vpack.c.b16 %v1719, %v1718
          %v1732 = vpack.c.b16 %v1721, %v1720
          %v1733 = vpack.c.b16 %v1723, %v1722
          %v1734 = vpack.c.b16 %v1725, %v1724
          %v1735 = vpack.c.b16 %v1727, %v1726
          %v1744 = vld [vmem:[#allocation10] sm:$0xf]
          %v1745 = vld [vmem:[#allocation10 + $0x4] sm:$0xf]
          %v1746 = vld [vmem:[#allocation10 + $0x8] sm:$0xf]
          %v1747 = vld [vmem:[#allocation10 + $0xc] sm:$0xf]
          %v1748 = vld [vmem:[#allocation10 + $0x10] sm:$0xf]
          %v1749 = vld [vmem:[#allocation10 + $0x14] sm:$0xf]
          %v1750 = vld [vmem:[#allocation10 + $0x18] sm:$0xf]
          %v1751 = vld [vmem:[#allocation10 + $0x1c] sm:$0xf]
          %v1752 = vld [vmem:[#allocation10 + $0x20] sm:$0xf]
          %v1753 = vld [vmem:[#allocation10 + $0x24] sm:$0xf]
          %v1754 = vld [vmem:[#allocation10 + $0x28] sm:$0xf]
          %v1755 = vld [vmem:[#allocation10 + $0x2c] sm:$0xf]
          %v1756 = vld [vmem:[#allocation10 + $0x30] sm:$0xf]
          %v1757 = vld [vmem:[#allocation10 + $0x34] sm:$0xf]
          %v1758 = vld [vmem:[#allocation10 + $0x38] sm:$0xf]
          %v1759 = vld [vmem:[#allocation10 + $0x3c] sm:$0xf]
          %v1760 = vld [vmem:[#allocation10 + $0x40] sm:$0xf]
          %v1761 = vld [vmem:[#allocation10 + $0x44] sm:$0xf]
          %v1762 = vld [vmem:[#allocation10 + $0x48] sm:$0xf]
          %v1763 = vld [vmem:[#allocation10 + $0x4c] sm:$0xf]
          %v1764 = vld [vmem:[#allocation10 + $0x50] sm:$0xf]
          %v1765 = vld [vmem:[#allocation10 + $0x54] sm:$0xf]
          %v1766 = vld [vmem:[#allocation10 + $0x58] sm:$0xf]
          %v1767 = vld [vmem:[#allocation10 + $0x5c] sm:$0xf]
          %v1768 = vld [vmem:[#allocation10 + $0x60] sm:$0xf]
          %v1769 = vld [vmem:[#allocation10 + $0x64] sm:$0xf]
          %v1770 = vld [vmem:[#allocation10 + $0x68] sm:$0xf]
          %v1771 = vld [vmem:[#allocation10 + $0x6c] sm:$0xf]
          %v1772 = vld [vmem:[#allocation10 + $0x70] sm:$0xf]
          %v1773 = vld [vmem:[#allocation10 + $0x74] sm:$0xf]
          %v1774 = vld [vmem:[#allocation10 + $0x78] sm:$0xf]
          %v1775 = vld [vmem:[#allocation10 + $0x7c] sm:$0xf]
          %v1808 = vunpack.c.l.b16 %v1744
          %v1809 = vunpack.c.l.b16 %v1745
          %v1810 = vunpack.c.l.b16 %v1746
          %v1811 = vunpack.c.l.b16 %v1747
          %v1812 = vunpack.c.l.b16 %v1748
          %v1813 = vunpack.c.l.b16 %v1749
          %v1814 = vunpack.c.l.b16 %v1750
          %v1815 = vunpack.c.l.b16 %v1751
          %v1816 = vunpack.c.l.b16 %v1752
          %v1817 = vunpack.c.l.b16 %v1753
          %v1818 = vunpack.c.l.b16 %v1754
          %v1819 = vunpack.c.l.b16 %v1755
          %v1820 = vunpack.c.l.b16 %v1756
          %v1821 = vunpack.c.l.b16 %v1757
          %v1822 = vunpack.c.l.b16 %v1758
          %v1823 = vunpack.c.l.b16 %v1759
          %v1824 = vunpack.c.l.b16 %v1760
          %v1825 = vunpack.c.l.b16 %v1761
          %v1826 = vunpack.c.l.b16 %v1762
          %v1827 = vunpack.c.l.b16 %v1763
          %v1828 = vunpack.c.l.b16 %v1764
          %v1829 = vunpack.c.l.b16 %v1765
          %v1830 = vunpack.c.l.b16 %v1766
          %v1831 = vunpack.c.l.b16 %v1767
          %v1832 = vunpack.c.l.b16 %v1768
          %v1833 = vunpack.c.l.b16 %v1769
          %v1834 = vunpack.c.l.b16 %v1770
          %v1835 = vunpack.c.l.b16 %v1771
          %v1836 = vunpack.c.l.b16 %v1772
          %v1837 = vunpack.c.l.b16 %v1773
          %v1838 = vunpack.c.l.b16 %v1774
          %v1839 = vunpack.c.l.b16 %v1775
          %v1840 = vpack.c.b16 %v1809, %v1808
          %v1841 = vpack.c.b16 %v1811, %v1810
          %v1842 = vpack.c.b16 %v1813, %v1812
          %v1843 = vpack.c.b16 %v1815, %v1814
          %v1844 = vpack.c.b16 %v1817, %v1816
          %v1845 = vpack.c.b16 %v1819, %v1818
          %v1846 = vpack.c.b16 %v1821, %v1820
          %v1847 = vpack.c.b16 %v1823, %v1822
          %v1848 = vpack.c.b16 %v1825, %v1824
          %v1849 = vpack.c.b16 %v1827, %v1826
          %v1850 = vpack.c.b16 %v1829, %v1828
          %v1851 = vpack.c.b16 %v1831, %v1830
          %v1852 = vpack.c.b16 %v1833, %v1832
          %v1853 = vpack.c.b16 %v1835, %v1834
          %v1854 = vpack.c.b16 %v1837, %v1836
          %v1855 = vpack.c.b16 %v1839, %v1838
          %1872 = vmatpush.bf16.msra.mxu0 %v1847
          %1873 = vmatpush.bf16.msra.mxu0 %v1846
          %1874 = vmatpush.bf16.msra.mxu0 %v1845
          %1875 = vmatpush.bf16.msra.mxu0 %v1844
          %1876 = vmatpush.bf16.msra.mxu0 %v1843
          %1877 = vmatpush.bf16.msra.mxu0 %v1842
          %1878 = vmatpush.bf16.msra.mxu0 %v1841
          %1879 = vmatpush.bf16.msra.mxu0 %v1840
          %1880 = vmatmul.bf16.gmra.mxu0 %v1680
          %v1881 = vpop.f32.mrf.mxu0
          %v1882 = vadd.f32 0.0, %v1881
          %v1883 = vpop.f32.mrf.mxu0
          %v1884 = vadd.f32 0.0, %v1883
          %1885 = vmatmul.bf16.gmra.mxu0 %v1681
          %v1886 = vpop.f32.mrf.mxu0
          %v1887 = vadd.f32 0.0, %v1886
          %v1888 = vpop.f32.mrf.mxu0
          %v1889 = vadd.f32 0.0, %v1888
          %1890 = vmatmul.bf16.gmra.mxu0 %v1682
          %v1891 = vpop.f32.mrf.mxu0
          %v1892 = vadd.f32 0.0, %v1891
          %v1893 = vpop.f32.mrf.mxu0
          %v1894 = vadd.f32 0.0, %v1893
          %1895 = vmatmul.bf16.gmra.mxu0 %v1683
          %v1896 = vpop.f32.mrf.mxu0
          %v1897 = vadd.f32 0.0, %v1896
          %v1898 = vpop.f32.mrf.mxu0
          %v1899 = vadd.f32 0.0, %v1898
          %1900 = vmatmul.bf16.gmra.mxu0 %v1684
          %v1901 = vpop.f32.mrf.mxu0
          %v1902 = vadd.f32 0.0, %v1901
          %v1903 = vpop.f32.mrf.mxu0
          %v1904 = vadd.f32 0.0, %v1903
          %1905 = vmatmul.bf16.gmra.mxu0 %v1685
          %v1906 = vpop.f32.mrf.mxu0
          %v1907 = vadd.f32 0.0, %v1906
          %v1908 = vpop.f32.mrf.mxu0
          %v1909 = vadd.f32 0.0, %v1908
          %1910 = vmatmul.bf16.gmra.mxu0 %v1686
          %v1911 = vpop.f32.mrf.mxu0
          %v1912 = vadd.f32 0.0, %v1911
          %v1913 = vpop.f32.mrf.mxu0
          %v1914 = vadd.f32 0.0, %v1913
          %1915 = vmatmul.bf16.gmra.mxu0 %v1687
          %v1916 = vpop.f32.mrf.mxu0
          %v1917 = vadd.f32 0.0, %v1916
          %v1918 = vpop.f32.mrf.mxu0
          %v1919 = vadd.f32 0.0, %v1918
          %1920 = vdwg.mxu0
          %1921 = vmatpush.bf16.msra.mxu0 %v1855
          %1922 = vmatpush.bf16.msra.mxu0 %v1854
          %1923 = vmatpush.bf16.msra.mxu0 %v1853
          %1924 = vmatpush.bf16.msra.mxu0 %v1852
          %1925 = vmatpush.bf16.msra.mxu0 %v1851
          %1926 = vmatpush.bf16.msra.mxu0 %v1850
          %1927 = vmatpush.bf16.msra.mxu0 %v1849
          %1928 = vmatpush.bf16.msra.mxu0 %v1848
          %1929 = vmatmul.bf16.gmra.mxu0 %v1728
          %v1930 = vpop.f32.mrf.mxu0
          %v1931 = vadd.f32 %v1882, %v1930
          %v1932 = vpop.f32.mrf.mxu0
          %v1933 = vadd.f32 %v1884, %v1932
          %1934 = vmatmul.bf16.gmra.mxu0 %v1729
          %v1935 = vpop.f32.mrf.mxu0
          %v1936 = vadd.f32 %v1887, %v1935
          %v1937 = vpop.f32.mrf.mxu0
          %v1938 = vadd.f32 %v1889, %v1937
          %1939 = vmatmul.bf16.gmra.mxu0 %v1730
          %v1940 = vpop.f32.mrf.mxu0
          %v1941 = vadd.f32 %v1892, %v1940
          %v1942 = vpop.f32.mrf.mxu0
          %v1943 = vadd.f32 %v1894, %v1942
          %1944 = vmatmul.bf16.gmra.mxu0 %v1731
          %v1945 = vpop.f32.mrf.mxu0
          %v1946 = vadd.f32 %v1897, %v1945
          %v1947 = vpop.f32.mrf.mxu0
          %v1948 = vadd.f32 %v1899, %v1947
          %1949 = vmatmul.bf16.gmra.mxu0 %v1732
          %v1950 = vpop.f32.mrf.mxu0
          %v1951 = vadd.f32 %v1902, %v1950
          %v1952 = vpop.f32.mrf.mxu0
          %v1953 = vadd.f32 %v1904, %v1952
          %1954 = vmatmul.bf16.gmra.mxu0 %v1733
          %v1955 = vpop.f32.mrf.mxu0
          %v1956 = vadd.f32 %v1907, %v1955
          %v1957 = vpop.f32.mrf.mxu0
          %v1958 = vadd.f32 %v1909, %v1957
          %1959 = vmatmul.bf16.gmra.mxu0 %v1734
          %v1960 = vpop.f32.mrf.mxu0
          %v1961 = vadd.f32 %v1912, %v1960
          %v1962 = vpop.f32.mrf.mxu0
          %v1963 = vadd.f32 %v1914, %v1962
          %1964 = vmatmul.bf16.gmra.mxu0 %v1735
          %v1965 = vpop.f32.mrf.mxu0
          %v1966 = vadd.f32 %v1917, %v1965
          %v1967 = vpop.f32.mrf.mxu0
          %v1968 = vadd.f32 %v1919, %v1967
          %1969 = vdwg.mxu0
          %v1970 = vmax.f32 %v1931, 0.0
          %v1971 = vmax.f32 %v1933, 0.0
          %v1972 = vmax.f32 %v1936, 0.0
          %v1973 = vmax.f32 %v1938, 0.0
          %v1974 = vmax.f32 %v1941, 0.0
          %v1975 = vmax.f32 %v1943, 0.0
          %v1976 = vmax.f32 %v1946, 0.0
          %v1977 = vmax.f32 %v1948, 0.0
          %v1978 = vmax.f32 %v1951, 0.0
          %v1979 = vmax.f32 %v1953, 0.0
          %v1980 = vmax.f32 %v1956, 0.0
          %v1981 = vmax.f32 %v1958, 0.0
          %v1982 = vmax.f32 %v1961, 0.0
          %v1983 = vmax.f32 %v1963, 0.0
          %v1984 = vmax.f32 %v1966, 0.0
          %v1985 = vmax.f32 %v1968, 0.0
          %1986 = vst [vmem:[%s332] sm:$0xff] %v1970
          %1987 = vst [vmem:[%s332 + $0x8] sm:$0xff] %v1971
          %1988 = vst [vmem:[%s332 + $0x10] sm:$0xff] %v1972
          %1989 = vst [vmem:[%s332 + $0x18] sm:$0xff] %v1973
          %1990 = vst [vmem:[%s332 + $0x20] sm:$0xff] %v1974
          %1991 = vst [vmem:[%s332 + $0x28] sm:$0xff] %v1975
          %1992 = vst [vmem:[%s332 + $0x30] sm:$0xff] %v1976
          %1993 = vst [vmem:[%s332 + $0x38] sm:$0xff] %v1977
          %1994 = vst [vmem:[%s332 + $0x40] sm:$0xff] %v1978
          %1995 = vst [vmem:[%s332 + $0x48] sm:$0xff] %v1979
          %1996 = vst [vmem:[%s332 + $0x50] sm:$0xff] %v1980
          %1997 = vst [vmem:[%s332 + $0x58] sm:$0xff] %v1981
          %1998 = vst [vmem:[%s332 + $0x60] sm:$0xff] %v1982
          %1999 = vst [vmem:[%s332 + $0x68] sm:$0xff] %v1983
          %2000 = vst [vmem:[%s332 + $0x70] sm:$0xff] %v1984
          %2001 = vst [vmem:[%s332 + $0x78] sm:$0xff] %v1985
        $region60: #{tpu_custom_call.1} parent=35 // pred_fallthru
          _
        %s2002 = sand.u32 %s146, 1
        %s2003 = scalar_lea.sflag [#allocation6], %s2002
        %s2004 = sand.u32 %s146, 1
        %s2005 = smul.addr %s2004, 128
        %s2006 = scalar_lea.vmem [#allocation12], %s2005
        // Predicated region
        $region61: #{tpu_custom_call.1} parent=35 // pred_check
          %p2007 = pneg %p156
        $region62: #{tpu_custom_call.1} parent=35 // pred_check_branch
          %2009 = sbr.rel (%p2007) target = $region64
        $region63: #{tpu_custom_call.1} parent=35 // pred_region
          %s2010 = smul.u32 16, %s29
          %2012 = vsyncadd %s2003, 0
          %s2013 = smul.addr %s2010, 8
          %s2014 = scalar_lea.hbm %s4, %s2013
          %s2015 = sshll.u32 %s2006, 4
          %s2016 = int_to_ptr.vmem [resolvable:$true] %s2015
          %s2017 = sshll.u32 %s2014, 4
          %s2018 = int_to_ptr.hbm [resolvable:$true] %s2017
          %2023 = dma.vmem_to_hbm [thread:$0]  %s2016, 2048, %s2018, %s2003, 128, 128, 8
        $region64: #{tpu_custom_call.1} parent=35 // pred_fallthru
          _
      $region36: #{tpu_custom_call.1} parent=5 // pred_fallthru
        _
      %p2024 = scmp.le.s32.totalorder 2, %s20
      // Predicated region
      $region65: #{tpu_custom_call.1} parent=5 // pred_check
        %p2025 = pneg %p2024
      $region66: #{tpu_custom_call.1} parent=5 // pred_check_branch
        %2027 = sbr.rel (%p2025) target = $region68
      $region67: #{tpu_custom_call.1} parent=5 // pred_region
        %s2028 = ssub.s32 %s20, 2
        // Predicated region
        $region69: #{tpu_custom_call.1} parent=67 // pred_check
          %p2029 = pneg %p162
        $region70: #{tpu_custom_call.1} parent=67 // pred_check_branch
          %2031 = sbr.rel (%p2029) target = $region72
        $region71: #{tpu_custom_call.1} parent=67 // pred_region
          %s2032 = sand.u32 %s147, 1
          %s2033 = scalar_lea.sflag [#allocation6], %s2032
          %s2034 = sand.u32 %s147, 1
          %s2035 = smul.addr %s2034, 128
          %s2036 = scalar_lea.vmem [#allocation12], %s2035
          %2038 = dma.done %s2033, 2048
        $region72: #{tpu_custom_call.1} parent=67 // pred_fallthru
          _
      $region68: #{tpu_custom_call.1} parent=5 // pred_fallthru
        _
    $region6: #{tpu_custom_call.1} parent=1 // loop_footer
      %s24 = sadd.s32 1, %s20
    $region7: #{tpu_custom_call.1} parent=1 // loop_footer_branch
      %19 = sbr.rel target = $region3
    $region8: #{tpu_custom_call.1} parent=1 // loop_exit
      _
    %2039 = vsyncpa [#allocation5], 1
    %s2040 = scalar_lea.sflag [#allocation5], 1
    %2041 = vsyncpa %s2040, 1
    %2042 = vsyncpa [#allocation8], 1
    %s2043 = scalar_lea.sflag [#allocation8], 1
    %2044 = vsyncpa %s2043, 1
    %2045 = vsyncpa [#allocation11], 1
    %2046 = vsyncpa [#allocation6], 1
    %s2047 = scalar_lea.sflag [#allocation6], 1
    %2048 = vsyncpa %s2047, 1

</llo_original>
